<compile_context>
chip_gen: v6e
topology: v6e:2x2x1
jax: 0.10.0
libtpu: 0.0.40
codegen_flags: <defaults>
</compile_context>

<pallas_src>
import functools

import jax
import jax.numpy as jnp
from jax import lax
from jax.experimental import pallas as pl
from jax.experimental.pallas import tpu as pltpu


def _fused_conv_relu_kernel(x_ref, t1_ref, b1_ref, t2_ref, b2_ref, o_ref,
                            y1_ref, *, kh):
    """One batch block: relu(conv2(relu(conv1(x)))) with each conv as ONE MXU dot.

    x_ref : (B, OH1, K1)          banded layer-1 rows (K1=128, cols >= 80 are 0)
    t1_ref: (K1, OW1*CP)          fused layer-1 weights (rows >= 80 are 0)
    b1_ref: (1, OW1*CP)           layer-1 bias tiled over OW1 (padded ch = 0)
    t2_ref: (KH*OW1*CP, OW2*CP)   fused layer-2 weights
    b2_ref: (1, OW2*CP)           layer-2 bias tiled over OW2
    o_ref : (B, OH2, OW2*CP)      flattened, channel-padded output
    y1_ref: (B, OH1, OW1*CP)      VMEM scratch: layer-1 activations
    """
    bb, oh1, k1 = x_ref.shape
    n1 = y1_ref.shape[-1]
    oh2 = o_ref.shape[1]

    # ---- layer 1: one (B*OH1, 128) @ (128, 384) dot, bias + ReLU fused ----
    y1 = jnp.dot(x_ref[...].reshape(bb * oh1, k1), t1_ref[...],
                 preferred_element_type=jnp.float32)
    y1_ref[...] = jnp.maximum(y1 + b1_ref[...], 0.0).reshape(bb, oh1, n1)

    # ---- layer 2: band rows of y1 (lane-aligned 384-wide pieces) into one
    #      (B*OH2, 1920) LHS, then one (B*OH2, 1920) @ (1920, 256) dot ----
    lhs2 = jnp.concatenate(
        [y1_ref[:, r:r + oh2, :] for r in range(kh)], axis=-1
    ).reshape(bb * oh2, kh * n1)
    y2 = jnp.dot(lhs2, t2_ref[...], preferred_element_type=jnp.float32)
    o_ref[...] = jnp.maximum(y2 + b2_ref[...], 0.0).reshape(
        bb, oh2, -1).astype(o_ref.dtype)


def fused_conv_relu_x2(x_band, t1, b1f, t2, b2f, *, block_b=32):
    """x_band: (N, OH1, K1) banded layer-1 input -> (N, OH2, OW2*CP) output."""
    n, oh1, k1 = x_band.shape
    n1_lanes = t1.shape[1]                 # OW1 * CP
    k2, n2_lanes = t2.shape                # (KH*OW1*CP, OW2*CP)
    kh = k2 // n1_lanes
    oh2 = oh1 - kh + 1

    # Batch block: B=32 -> M=256 per dot (full MXU height on v6e/v7x; v5e's
    # 128x128 MXU is already saturated).  Pad N up to a multiple of the block.
    bb = max(1, min(block_b, n))
    n_pad = pl.cdiv(n, bb) * bb
    if n_pad != n:
        x_band = jnp.pad(x_band, ((0, n_pad - n), (0, 0), (0, 0)))

    kernel = functools.partial(_fused_conv_relu_kernel, kh=kh)
    out = pl.pallas_call(
        kernel,
        out_shape=jax.ShapeDtypeStruct((n_pad, oh2, n2_lanes), x_band.dtype),
        grid_spec=pltpu.PrefetchScalarGridSpec(
            num_scalar_prefetch=0,
            grid=(n_pad // bb,),
            in_specs=[
                pl.BlockSpec((bb, oh1, k1), lambda i: (i, 0, 0)),
                pl.BlockSpec(t1.shape, lambda i: (0, 0)),    # constant weights
                pl.BlockSpec(b1f.shape, lambda i: (0, 0)),
                pl.BlockSpec(t2.shape, lambda i: (0, 0)),
                pl.BlockSpec(b2f.shape, lambda i: (0, 0)),
            ],
            out_specs=pl.BlockSpec((bb, oh2, n2_lanes), lambda i: (i, 0, 0)),
            scratch_shapes=[pltpu.VMEM((bb, oh1, n1_lanes), jnp.float32)],
        ),
        compiler_params=pltpu.CompilerParams(
            dimension_semantics=("parallel",),   # batch blocks -> v7x megacore
        ),
    )(x_band, t1, b1f, t2, b2f)
    return out[:n]


def _pack_banded_conv(w_hwio, bias, *, in_w, out_w, cin_pad, cout_pad, k_pad=None):
    """Fold a valid, stride-1 conv's (kw, cin) contraction into a banded matrix
    and fuse the kh axis into the rows, so the whole conv is one matmul:

        y[oh, ow*cout_pad + co] =
            bias[co] + sum_{kh,w,ci} xband[oh, kh*in_w*cin_pad + w*cin_pad + ci]
                                     * T[kh*in_w*cin_pad + w*cin_pad + ci,
                                         ow*cout_pad + co]

    with T rows zero outside 0 <= w-ow < kw and in padded channel slots.
    Built once in plain JAX (weight plumbing, not kernel compute).
    """
    kh, kw, cin, cout = w_hwio.shape
    w_idx = jnp.arange(in_w)[:, None]
    ow_idx = jnp.arange(out_w)[None, :]
    q = w_idx - ow_idx                                      # (in_w, out_w)
    valid = (q >= 0) & (q < kw)
    qc = jnp.clip(q, 0, kw - 1)
    band = w_hwio[:, qc, :, :]                              # (KH, in_w, out_w, cin, cout)
    band = jnp.where(valid[None, :, :, None, None], band, 0.0)
    band = jnp.transpose(band, (0, 1, 3, 2, 4))             # (KH, in_w, cin, out_w, cout)
    band = jnp.pad(band, ((0, 0), (0, 0), (0, cin_pad - cin),
                          (0, 0), (0, cout_pad - cout)))
    t_fused = band.reshape(kh * in_w * cin_pad, out_w * cout_pad)
    if k_pad is not None and k_pad > t_fused.shape[0]:
        t_fused = jnp.pad(t_fused, ((0, k_pad - t_fused.shape[0]), (0, 0)))
    b_flat = jnp.tile(jnp.pad(bias, (0, cout_pad - cout)), out_w)[None, :]
    return t_fused, b_flat


class SimpleModelPallas:
    """Pallas re-implementation of the PyTorch SimpleModel forward pass."""

    C1 = 20      # conv1 out channels
    C2 = 20      # conv2 out channels
    K = 5        # kernel size
    CPAD = 32    # channel padding -> output row is 8*32 = 256 lanes (2 vregs)
    K1PAD = 128  # layer-1 contraction (5*16=80) padded to a full lane tile

    def __init__(self, key, image_hw=(16, 16), batch_block=32):
        k1, k2, k3, k4 = jax.random.split(key, 4)
        kk, c1, c2 = self.K, self.C1, self.C2
        bound1 = 1.0 / (1 * kk * kk) ** 0.5
        bound2 = 1.0 / (c1 * kk * kk) ** 0.5
        self.w1 = jax.random.uniform(k1, (kk, kk, 1, c1), jnp.float32, -bound1, bound1)
        self.b1 = jax.random.uniform(k2, (c1,), jnp.float32, -bound1, bound1)
        self.w2 = jax.random.uniform(k3, (kk, kk, c1, c2), jnp.float32, -bound2, bound2)
        self.b2 = jax.random.uniform(k4, (c2,), jnp.float32, -bound2, bound2)

        h, w = image_hw
        self._hw = image_hw
        self._oh1, self._ow1 = h - kk + 1, w - kk + 1
        self._oh2, self._ow2 = self._oh1 - kk + 1, self._ow1 - kk + 1
        self.batch_block = batch_block

        # Banded, kh-fused weight matrices ("im2col folded into the weights"),
        # built once in plain JAX.
        self.t1, self.b1_flat = _pack_banded_conv(
            self.w1, self.b1, in_w=w, out_w=self._ow1,
            cin_pad=1, cout_pad=self.CPAD, k_pad=self.K1PAD)
        self.t2, self.b2_flat = _pack_banded_conv(
            self.w2, self.b2, in_w=self._ow1, out_w=self._ow2,
            cin_pad=self.CPAD, cout_pad=self.CPAD)

    def forward(self, x_nchw, block_b=None):
        n, c, h, w = x_nchw.shape
        assert c == 1 and (h, w) == self._hw
        x = x_nchw[:, 0, :, :]                               # NCHW, Cin=1 -> (N, H, W)
        oh1 = self._oh1
        # Layer-1 row im2col in the wrapper (plain-JAX glue): banded rows are
        # (N, OH1, 5*W=80) zero-padded to 128 lanes -> lane-dense kernel LHS.
        x_band = jnp.concatenate([x[:, r:r + oh1, :] for r in range(self.K)], axis=-1)
        x_band = jnp.pad(x_band, ((0, 0), (0, 0), (0, self.K1PAD - x_band.shape[-1])))
        y = fused_conv_relu_x2(
            x_band, self.t1, self.b1_flat, self.t2, self.b2_flat,
            block_b=self.batch_block if block_b is None else block_b)
        # (N, OH2, OW2*CPAD) -> (N, OH2, OW2, CPAD) -> drop channel pad -> NCHW
        y = y.reshape(n, self._oh2, self._ow2, self.CPAD)[..., :self.C2]
        return jnp.transpose(y, (0, 3, 1, 2))


def _reference_forward(x_nchw, w1, b1, w2, b2):
    x = jnp.transpose(x_nchw, (0, 2, 3, 1))
    dn1 = lax.conv_dimension_numbers(x.shape, w1.shape, ("NHWC", "HWIO", "NHWC"))
    y = lax.conv_general_dilated(x, w1, (1, 1), "VALID", dimension_numbers=dn1)
    y = jnp.maximum(y + b1, 0.0)
    dn2 = lax.conv_dimension_numbers(y.shape, w2.shape, ("NHWC", "HWIO", "NHWC"))
    y = lax.conv_general_dilated(y, w2, (1, 1), "VALID", dimension_numbers=dn2)
    y = jnp.maximum(y + b2, 0.0)
    return jnp.transpose(y, (0, 3, 1, 2))


if __name__ == "__main__":
    key = jax.random.PRNGKey(0)
    k_param, k_input = jax.random.split(key)

    model = SimpleModelPallas(k_param, image_hw=(16, 16))

    # Small NCHW input consistent with conv1's single input channel.
    x = jax.random.normal(k_input, (2, 1, 16, 16), jnp.float32)
    out = jax.block_until_ready(model.forward(x))

    expected = _reference_forward(x, model.w1, model.b1, model.w2, model.b2)
    assert out.shape == (2, 20, 8, 8), out.shape
    assert jnp.allclose(out, expected, rtol=1e-4, atol=5e-4), \
        "mismatch vs XLA conv reference"

    # Extra coverage for the new batching path: N not a multiple of the block
    # and a grid with >1 step (block_b=2 -> N padded 5 -> 6, grid of 3 steps).
    x5 = jax.random.normal(jax.random.PRNGKey(1), (5, 1, 16, 16), jnp.float32)
    out5 = jax.block_until_ready(model.forward(x5, block_b=2))
    exp5 = _reference_forward(x5, model.w1, model.b1, model.w2, model.b2)
    assert out5.shape == (5, 20, 8, 8), out5.shape
    assert jnp.allclose(out5, exp5, rtol=1e-4, atol=5e-4), \
        "mismatch vs XLA conv reference (batched/padded path)"

    print("KERNEL_OK")
</pallas_src>

<mosaic_0001>
module attributes {stable_mosaic.version = 11 : i64} {
  func.func @_fused_conv_relu_kernel(%arg0: i32, %arg1: memref<2x12x128xf32, #tpu.memory_space<vmem>>, %arg2: memref<128x384xf32, #tpu.memory_space<vmem>>, %arg3: memref<1x384xf32, #tpu.memory_space<vmem>>, %arg4: memref<1920x256xf32, #tpu.memory_space<vmem>>, %arg5: memref<1x256xf32, #tpu.memory_space<vmem>>, %arg6: memref<2x8x256xf32, #tpu.memory_space<vmem>>, %arg7: memref<2x12x384xf32, #tpu.memory_space<vmem>>) attributes {dimension_semantics = [#tpu.dimension_semantics<parallel>], iteration_bounds = array<i64: 1>, scalar_prefetch = 0 : i64, scratch_operands = 1 : i64, tpu.core_type = #tpu.core_type<tc>, window_params = [{transform_indices = @transform_0, window_bounds = array<i64: 2, 12, 128>}, {pipeline_mode = #tpu.pipeline_mode<synchronous>, transform_indices = @transform_1, window_bounds = array<i64: 128, 384>}, {pipeline_mode = #tpu.pipeline_mode<synchronous>, transform_indices = @transform_2, window_bounds = array<i64: 1, 384>}, {pipeline_mode = #tpu.pipeline_mode<synchronous>, transform_indices = @transform_3, window_bounds = array<i64: 1920, 256>}, {pipeline_mode = #tpu.pipeline_mode<synchronous>, transform_indices = @transform_4, window_bounds = array<i64: 1, 256>}, {transform_indices = @transform_5, window_bounds = array<i64: 2, 8, 256>}]} {
    %c0 = arith.constant 0 : index
    %c0_0 = arith.constant 0 : index
    %c0_1 = arith.constant 0 : index
    %0 = vector.load %arg1[%c0, %c0_0, %c0_1] : memref<2x12x128xf32, #tpu.memory_space<vmem>>, vector<2x12x128xf32>
    %1 = vector.shape_cast %0 : vector<2x12x128xf32> to vector<24x128xf32>
    %c0_2 = arith.constant 0 : index
    %c0_3 = arith.constant 0 : index
    %2 = vector.load %arg2[%c0_2, %c0_3] : memref<128x384xf32, #tpu.memory_space<vmem>>, vector<128x384xf32>
    %cst = arith.constant dense<0.000000e+00> : vector<24x384xf32>
    %3 = tpu.matmul %1, %2, %cst {dimension_numbers = #tpu.dot_dimension_numbers<[1], [0], [0], [1], [0, 0, 1, 1], [], []>} : vector<24x128xf32>, vector<128x384xf32>, vector<24x384xf32> -> vector<24x384xf32>
    %c0_4 = arith.constant 0 : index
    %c0_5 = arith.constant 0 : index
    %4 = vector.load %arg3[%c0_4, %c0_5] : memref<1x384xf32, #tpu.memory_space<vmem>>, vector<1x384xf32>
    %5 = vector.broadcast %4 : vector<1x384xf32> to vector<24x384xf32>
    %6 = arith.addf %3, %5 : vector<24x384xf32>
    %cst_6 = arith.constant 0.000000e+00 : f32
    %7 = vector.broadcast %cst_6 : f32 to vector<24x384xf32>
    %8 = arith.maximumf %6, %7 : vector<24x384xf32>
    %9 = vector.shape_cast %8 : vector<24x384xf32> to vector<2x12x384xf32>
    %c0_7 = arith.constant 0 : index
    %c0_8 = arith.constant 0 : index
    %c0_9 = arith.constant 0 : index
    %10 = vector.load %arg7[%c0_7, %c0_8, %c0_9] : memref<2x12x384xf32, #tpu.memory_space<vmem>>, vector<2x12x384xf32>
    tpu.vector_store %arg7[%c0_7, %c0_8, %c0_9], %9 {strides = array<i32>} : memref<2x12x384xf32, #tpu.memory_space<vmem>>, vector<2x12x384xf32>,
    %c0_10 = arith.constant 0 : index
    %c0_11 = arith.constant 0 : index
    %c0_12 = arith.constant 0 : index
    %11 = vector.load %arg7[%c0_10, %c0_11, %c0_12] : memref<2x12x384xf32, #tpu.memory_space<vmem>>, vector<2x8x384xf32>
    %c0_13 = arith.constant 0 : index
    %c1 = arith.constant 1 : index
    %c0_14 = arith.constant 0 : index
    %12 = vector.load %arg7[%c0_13, %c1, %c0_14] : memref<2x12x384xf32, #tpu.memory_space<vmem>>, vector<2x8x384xf32>
    %c0_15 = arith.constant 0 : index
    %c2 = arith.constant 2 : index
    %c0_16 = arith.constant 0 : index
    %13 = vector.load %arg7[%c0_15, %c2, %c0_16] : memref<2x12x384xf32, #tpu.memory_space<vmem>>, vector<2x8x384xf32>
    %c0_17 = arith.constant 0 : index
    %c3 = arith.constant 3 : index
    %c0_18 = arith.constant 0 : index
    %14 = vector.load %arg7[%c0_17, %c3, %c0_18] : memref<2x12x384xf32, #tpu.memory_space<vmem>>, vector<2x8x384xf32>
    %c0_19 = arith.constant 0 : index
    %c4 = arith.constant 4 : index
    %c0_20 = arith.constant 0 : index
    %15 = vector.load %arg7[%c0_19, %c4, %c0_20] : memref<2x12x384xf32, #tpu.memory_space<vmem>>, vector<2x8x384xf32>
    %16 = tpu.concatenate %11, %12, %13, %14, %15 in 2 : vector<2x8x384xf32>, vector<2x8x384xf32>, vector<2x8x384xf32>, vector<2x8x384xf32>, vector<2x8x384xf32> -> vector<2x8x1920xf32>
    %17 = vector.shape_cast %16 : vector<2x8x1920xf32> to vector<16x1920xf32>
    %c0_21 = arith.constant 0 : index
    %c0_22 = arith.constant 0 : index
    %18 = vector.load %arg4[%c0_21, %c0_22] : memref<1920x256xf32, #tpu.memory_space<vmem>>, vector<1920x256xf32>
    %cst_23 = arith.constant dense<0.000000e+00> : vector<16x256xf32>
    %19 = tpu.matmul %17, %18, %cst_23 {dimension_numbers = #tpu.dot_dimension_numbers<[1], [0], [0], [1], [0, 0, 1, 1], [], []>} : vector<16x1920xf32>, vector<1920x256xf32>, vector<16x256xf32> -> vector<16x256xf32>
    %c0_24 = arith.constant 0 : index
    %c0_25 = arith.constant 0 : index
    %20 = vector.load %arg5[%c0_24, %c0_25] : memref<1x256xf32, #tpu.memory_space<vmem>>, vector<1x256xf32>
    %21 = vector.broadcast %20 : vector<1x256xf32> to vector<16x256xf32>
    %22 = arith.addf %19, %21 : vector<16x256xf32>
    %cst_26 = arith.constant 0.000000e+00 : f32
    %23 = vector.broadcast %cst_26 : f32 to vector<16x256xf32>
    %24 = arith.maximumf %22, %23 : vector<16x256xf32>
    %25 = vector.shape_cast %24 : vector<16x256xf32> to vector<2x8x256xf32>
    %c0_27 = arith.constant 0 : index
    %c0_28 = arith.constant 0 : index
    %c0_29 = arith.constant 0 : index
    %26 = vector.load %arg6[%c0_27, %c0_28, %c0_29] : memref<2x8x256xf32, #tpu.memory_space<vmem>>, vector<2x8x256xf32>
    tpu.vector_store %arg6[%c0_27, %c0_28, %c0_29], %25 {strides = array<i32>} : memref<2x8x256xf32, #tpu.memory_space<vmem>>, vector<2x8x256xf32>,
    return
  }
  func.func @transform_0(%arg0: i32) -> (i32, i32, i32) {
    %c0_i32 = arith.constant 0 : i32
    %c0_i32_0 = arith.constant 0 : i32
    %c0_i32_1 = arith.constant 0 : i32
    return %arg0, %c0_i32, %c0_i32_0 : i32, i32, i32
  }
  func.func @transform_1(%arg0: i32) -> (i32, i32) {
    %c0_i32 = arith.constant 0 : i32
    %c0_i32_0 = arith.constant 0 : i32
    %c0_i32_1 = arith.constant 0 : i32
    return %c0_i32, %c0_i32_0 : i32, i32
  }
  func.func @transform_2(%arg0: i32) -> (i32, i32) {
    %c0_i32 = arith.constant 0 : i32
    %c0_i32_0 = arith.constant 0 : i32
    %c0_i32_1 = arith.constant 0 : i32
    return %c0_i32, %c0_i32_0 : i32, i32
  }
  func.func @transform_3(%arg0: i32) -> (i32, i32) {
    %c0_i32 = arith.constant 0 : i32
    %c0_i32_0 = arith.constant 0 : i32
    %c0_i32_1 = arith.constant 0 : i32
    return %c0_i32, %c0_i32_0 : i32, i32
  }
  func.func @transform_4(%arg0: i32) -> (i32, i32) {
    %c0_i32 = arith.constant 0 : i32
    %c0_i32_0 = arith.constant 0 : i32
    %c0_i32_1 = arith.constant 0 : i32
    return %c0_i32, %c0_i32_0 : i32, i32
  }
  func.func @transform_5(%arg0: i32) -> (i32, i32, i32) {
    %c0_i32 = arith.constant 0 : i32
    %c0_i32_0 = arith.constant 0 : i32
    %c0_i32_1 = arith.constant 0 : i32
    return %arg0, %c0_i32, %c0_i32_0 : i32, i32, i32
  }
}

</mosaic_0001>

<llo_original>
// kernel: tpu_custom_call.1
$region0: #{tpu_custom_call.1}
  #allocation0 [shape = 'u32[]', space=smem, size = 0x4, offset = 0x4, fixed_abs, tag = 'smem constant byte address 0x4 - core index']
  #allocation1 [shape = 'u32[144,128]{1,0:T(1,128)}', space=vmem, size = 0x12000, scoped, tag = 'internal scratch']
  #allocation2 [shape = 'f32[2,12,384]{2,1,0:T(8,128)}', space=vmem, size = 0xc000, scoped, tag = 'scratch operand']
  %s0 = inlined_call_operand.vmem [shape: f32[2,12,128], index: 0, kind: input, shape index: {}]
  %s1 = inlined_call_operand.hbm [shape: f32[128,384], index: 1, kind: input, shape index: {}]
  %s2 = inlined_call_operand.hbm [shape: f32[1,384], index: 2, kind: input, shape index: {}]
  %s3 = inlined_call_operand.hbm [shape: f32[1920,256], index: 3, kind: input, shape index: {}]
  %s4 = inlined_call_operand.hbm [shape: f32[1,256], index: 4, kind: input, shape index: {}]
  %s5 = inlined_call_operand.hbm [shape: f32[2,8,256], index: 5, kind: output, shape index: {}]
  %s6 = sld [smem:[#allocation0]]
  $region46: #{tpu_custom_call.1} parent=0
    _
  %s8 = ssub.s32 1, %s6
  %s9 = scalar_select 0, %s8, %s6
  $region1: #{tpu_custom_call.1} parent=0
    #allocation3 [shape = 'u8[196608]{0}', space=vmem, size = 0x30000, scoped, tag = 'input window, operand 1, single buffered']
    #allocation4 [shape = 's32[1]{0}', space=sflag, size = 0x4, scoped, tag = 'scoped memory for tpu_custom_call.1']
    #allocation5 [shape = 's32[1]{0}', space=sflag, size = 0x4, scoped, tag = 'scoped memory for tpu_custom_call.1']
    #allocation6 [shape = 'u8[1536]{0}', space=vmem, size = 0x800, scoped, tag = 'input window, operand 2, single buffered']
    #allocation7 [shape = 's32[1]{0}', space=sflag, size = 0x4, scoped, tag = 'scoped memory for tpu_custom_call.1']
    #allocation8 [shape = 'u8[1966080]{0}', space=vmem, size = 0x1e0000, scoped, tag = 'input window, operand 3, single buffered']
    #allocation9 [shape = 'u8[1024]{0}', space=vmem, size = 0x400, scoped, tag = 'input window, operand 4, single buffered']
    #allocation10 [shape = 's32[1]{0}', space=sflag, size = 0x4, scoped, tag = 'scoped memory for tpu_custom_call.1']
    #allocation11 [shape = 'u8[16384]{0}', space=vmem, size = 0x4000, scoped, tag = 'output window, operand 0, single buffered']
    %10 = vsyncpa [#allocation4], 0
    %11 = vsyncpa [#allocation7], 0
    %12 = vsyncpa [#allocation10], 0
    %13 = vsyncpa [#allocation5], 0
    // Predicated region
    $region2: #{tpu_custom_call.1} parent=1 // pred_check
      _
    $region3: #{tpu_custom_call.1} parent=1 // pred_check_branch
      %15 = sbr.rel (0) target = $region5
    $region4: #{tpu_custom_call.1} parent=1 // pred_region
      _
    $region5: #{tpu_custom_call.1} parent=1 // pred_fallthru
      _
    // Predicated region
    $region6: #{tpu_custom_call.1} parent=1 // pred_check
      _
    $region7: #{tpu_custom_call.1} parent=1 // pred_check_branch
      %17 = sbr.rel (0) target = $region9
    $region8: #{tpu_custom_call.1} parent=1 // pred_region
      %s19 = ssub.s32 6144, 6144
      %20 = vsyncadd [#allocation4], %s19
      %s21 = sshll.u32 [#allocation3], 4
      %s22 = int_to_ptr.vmem [resolvable:$true] %s21
      %27 = dma.hbm_to_vmem [thread:$0]  %s1, 6144, %s22, [#allocation4], 384, 384, 24
    $region9: #{tpu_custom_call.1} parent=1 // pred_fallthru
      _
    // Predicated region
    $region10: #{tpu_custom_call.1} parent=1 // pred_check
      _
    $region11: #{tpu_custom_call.1} parent=1 // pred_check_branch
      %29 = sbr.rel (0) target = $region13
    $region12: #{tpu_custom_call.1} parent=1 // pred_region
      %s31 = ssub.s32 48, 48
      %32 = vsyncadd [#allocation7], %s31
      %s34 = sshll.u32 [#allocation6], 4
      %s35 = int_to_ptr.vmem [resolvable:$true] %s34
      %37 = dma.hbm_to_vmem [thread:$0]  %s2, 48, %s35, [#allocation7]
    $region13: #{tpu_custom_call.1} parent=1 // pred_fallthru
      _
    // Predicated region
    $region14: #{tpu_custom_call.1} parent=1 // pred_check
      _
    $region15: #{tpu_custom_call.1} parent=1 // pred_check_branch
      %39 = sbr.rel (0) target = $region17
    $region16: #{tpu_custom_call.1} parent=1 // pred_region
      %s41 = ssub.s32 61440, 61440
      %42 = vsyncadd [#allocation7], %s41
      %s43 = sshll.u32 [#allocation8], 4
      %s44 = int_to_ptr.vmem [resolvable:$true] %s43
      %49 = dma.hbm_to_vmem [thread:$0]  %s3, 61440, %s44, [#allocation7], 256, 256, 16
    $region17: #{tpu_custom_call.1} parent=1 // pred_fallthru
      _
    // Predicated region
    $region18: #{tpu_custom_call.1} parent=1 // pred_check
      _
    $region19: #{tpu_custom_call.1} parent=1 // pred_check_branch
      %51 = sbr.rel (0) target = $region21
    $region20: #{tpu_custom_call.1} parent=1 // pred_region
      %s53 = ssub.s32 32, 32
      %54 = vsyncadd [#allocation10], %s53
      %s56 = sshll.u32 [#allocation9], 4
      %s57 = int_to_ptr.vmem [resolvable:$true] %s56
      %59 = dma.hbm_to_vmem [thread:$0]  %s4, 32, %s57, [#allocation10]
    $region21: #{tpu_custom_call.1} parent=1 // pred_fallthru
      _
    // Predicated region
    $region22: #{tpu_custom_call.1} parent=1 // pred_check
      _
    $region23: #{tpu_custom_call.1} parent=1 // pred_check_branch
      %61 = sbr.rel (0) target = $region25
    $region24: #{tpu_custom_call.1} parent=1 // pred_region
      %62 = dma.done [#allocation4], 6144
    $region25: #{tpu_custom_call.1} parent=1 // pred_fallthru
      _
    // Predicated region
    $region26: #{tpu_custom_call.1} parent=1 // pred_check
      _
    $region27: #{tpu_custom_call.1} parent=1 // pred_check_branch
      %64 = sbr.rel (0) target = $region29
    $region28: #{tpu_custom_call.1} parent=1 // pred_region
      %65 = dma.done [#allocation7], 48
    $region29: #{tpu_custom_call.1} parent=1 // pred_fallthru
      _
    // Predicated region
    $region30: #{tpu_custom_call.1} parent=1 // pred_check
      _
    $region31: #{tpu_custom_call.1} parent=1 // pred_check_branch
      %67 = sbr.rel (0) target = $region33
    $region32: #{tpu_custom_call.1} parent=1 // pred_region
      %68 = dma.done [#allocation7], 61440
    $region33: #{tpu_custom_call.1} parent=1 // pred_fallthru
      _
    // Predicated region
    $region34: #{tpu_custom_call.1} parent=1 // pred_check
      _
    $region35: #{tpu_custom_call.1} parent=1 // pred_check_branch
      %70 = sbr.rel (0) target = $region37
    $region36: #{tpu_custom_call.1} parent=1 // pred_region
      %71 = dma.done [#allocation10], 32
    $region37: #{tpu_custom_call.1} parent=1 // pred_fallthru
      _
    %v72 = vld [vmem:[%s0] sm:$0xff]
    %v73 = vld [vmem:[%s0 + $0x8] sm:$0xf]
    %v74 = vld [vmem:[%s0 + $0x10] sm:$0xff]
    %v75 = vld [vmem:[%s0 + $0x18] sm:$0xf]
    %v80 = vcombine.high %v72, %v72
    %v81 = vcombine.high %v74, %v74
    %v82 = vld [vmem:[#allocation3] sm:$0xff]
    %v83 = vld [vmem:[#allocation3 + $0x8] sm:$0xff]
    %v84 = vld [vmem:[#allocation3 + $0x10] sm:$0xff]
    %v85 = vld [vmem:[#allocation3 + $0x18] sm:$0xff]
    %v86 = vld [vmem:[#allocation3 + $0x20] sm:$0xff]
    %v87 = vld [vmem:[#allocation3 + $0x28] sm:$0xff]
    %v88 = vld [vmem:[#allocation3 + $0x30] sm:$0xff]
    %v89 = vld [vmem:[#allocation3 + $0x38] sm:$0xff]
    %v90 = vld [vmem:[#allocation3 + $0x40] sm:$0xff]
    %v91 = vld [vmem:[#allocation3 + $0x48] sm:$0xff]
    %v92 = vld [vmem:[#allocation3 + $0x50] sm:$0xff]
    %v93 = vld [vmem:[#allocation3 + $0x58] sm:$0xff]
    %v94 = vld [vmem:[#allocation3 + $0x60] sm:$0xff]
    %v95 = vld [vmem:[#allocation3 + $0x68] sm:$0xff]
    %v96 = vld [vmem:[#allocation3 + $0x70] sm:$0xff]
    %v97 = vld [vmem:[#allocation3 + $0x78] sm:$0xff]
    %v98 = vld [vmem:[#allocation3 + $0x80] sm:$0xff]
    %v99 = vld [vmem:[#allocation3 + $0x88] sm:$0xff]
    %v100 = vld [vmem:[#allocation3 + $0x90] sm:$0xff]
    %v101 = vld [vmem:[#allocation3 + $0x98] sm:$0xff]
    %v102 = vld [vmem:[#allocation3 + $0xa0] sm:$0xff]
    %v103 = vld [vmem:[#allocation3 + $0xa8] sm:$0xff]
    %v104 = vld [vmem:[#allocation3 + $0xb0] sm:$0xff]
    %v105 = vld [vmem:[#allocation3 + $0xb8] sm:$0xff]
    %v106 = vld [vmem:[#allocation3 + $0xc0] sm:$0xff]
    %v107 = vld [vmem:[#allocation3 + $0xc8] sm:$0xff]
    %v108 = vld [vmem:[#allocation3 + $0xd0] sm:$0xff]
    %v109 = vld [vmem:[#allocation3 + $0xd8] sm:$0xff]
    %v110 = vld [vmem:[#allocation3 + $0xe0] sm:$0xff]
    %v111 = vld [vmem:[#allocation3 + $0xe8] sm:$0xff]
    %v112 = vld [vmem:[#allocation3 + $0xf0] sm:$0xff]
    %v113 = vld [vmem:[#allocation3 + $0xf8] sm:$0xff]
    %v114 = vld [vmem:[#allocation3 + $0x100] sm:$0xff]
    %v115 = vld [vmem:[#allocation3 + $0x108] sm:$0xff]
    %v116 = vld [vmem:[#allocation3 + $0x110] sm:$0xff]
    %v117 = vld [vmem:[#allocation3 + $0x118] sm:$0xff]
    %v118 = vld [vmem:[#allocation3 + $0x120] sm:$0xff]
    %v119 = vld [vmem:[#allocation3 + $0x128] sm:$0xff]
    %v120 = vld [vmem:[#allocation3 + $0x130] sm:$0xff]
    %v121 = vld [vmem:[#allocation3 + $0x138] sm:$0xff]
    %v122 = vld [vmem:[#allocation3 + $0x140] sm:$0xff]
    %v123 = vld [vmem:[#allocation3 + $0x148] sm:$0xff]
    %v124 = vld [vmem:[#allocation3 + $0x150] sm:$0xff]
    %v125 = vld [vmem:[#allocation3 + $0x158] sm:$0xff]
    %v126 = vld [vmem:[#allocation3 + $0x160] sm:$0xff]
    %v127 = vld [vmem:[#allocation3 + $0x168] sm:$0xff]
    %v128 = vld [vmem:[#allocation3 + $0x170] sm:$0xff]
    %v129 = vld [vmem:[#allocation3 + $0x178] sm:$0xff]
    %v130 = vld [vmem:[#allocation6] sm:$0x7]
    %v132 = vlaneseq
    %v133 = vshrl.u32 %v132, 7
    %v134 = vsub.s32 0, %v133
    %v135 = vrot.slane %v130, %v134
    %v136 = vlaneseq
    %v137 = vshrl.u32 %v136, 7
    %v138 = vsub.s32 1, %v137
    %v139 = vrot.slane %v130, %v138
    %v140 = vlaneseq
    %v141 = vshrl.u32 %v140, 7
    %v142 = vsub.s32 2, %v141
    %v143 = vrot.slane %v130, %v142
    %v147 = vcombine.low %v72, %v80
    %v148 = vcombine.low %v73, %v74
    %v149 = vcombine.low %v81, %v75
    %153 = vmatprep.subr.mxu0 %v128
    %154 = vmatpush1.msra.mxu0 %v127
    %155 = vmatprep.subr.mxu0 %v125
    %156 = vmatpush1.msra.mxu0 %v124
    %157 = vmatprep.subr.mxu0 %v122
    %158 = vmatpush1.msra.mxu0 %v121
    %159 = vmatprep.subr.mxu0 %v119
    %160 = vmatpush1.msra.mxu0 %v118
    %161 = vmatprep.subr.mxu0 %v116
    %162 = vmatpush1.msra.mxu0 %v115
    %163 = vmatprep.subr.mxu0 %v113
    %164 = vmatpush1.msra.mxu0 %v112
    %165 = vmatprep.subr.mxu0 %v110
    %166 = vmatpush1.msra.mxu0 %v109
    %167 = vmatprep.subr.mxu0 %v107
    %168 = vmatpush1.msra.mxu0 %v106
    %169 = vmatprep.subr.mxu0 %v104
    %170 = vmatpush1.msra.mxu0 %v103
    %171 = vmatprep.subr.mxu0 %v101
    %172 = vmatpush1.msra.mxu0 %v100
    %173 = vmatprep.subr.mxu0 %v98
    %174 = vmatpush1.msra.mxu0 %v97
    %175 = vmatprep.subr.mxu0 %v95
    %176 = vmatpush1.msra.mxu0 %v94
    %177 = vmatprep.subr.mxu0 %v92
    %178 = vmatpush1.msra.mxu0 %v91
    %179 = vmatprep.subr.mxu0 %v89
    %180 = vmatpush1.msra.mxu0 %v88
    %181 = vmatprep.subr.mxu0 %v86
    %182 = vmatpush1.msra.mxu0 %v85
    %183 = vmatprep.subr.mxu0 %v83
    %184 = vmatpush1.msra.mxu0 %v82
    %185 = vmatprep.subr.mxu0 0.0
    %186 = vmatpush2.msra.mxu0 0.0
    %187 = vmatprep.subr.mxu0 0.0
    %188 = vmatpush2.msra.mxu0 0.0
    %189 = vmatprep.subr.mxu0 0.0
    %190 = vmatpush2.msra.mxu0 0.0
    %191 = vmatprep.subr.mxu0 0.0
    %192 = vmatpush2.msra.mxu0 0.0
    %193 = vmatprep.subr.mxu0 0.0
    %194 = vmatpush2.msra.mxu0 0.0
    %195 = vmatprep.subr.mxu0 0.0
    %196 = vmatpush2.msra.mxu0 0.0
    %197 = vmatprep.subr.mxu0 0.0
    %198 = vmatpush2.msra.mxu0 0.0
    %199 = vmatprep.subr.mxu0 0.0
    %200 = vmatpush2.msra.mxu0 0.0
    %201 = vmatprep.subr.mxu0 0.0
    %202 = vmatpush2.msra.mxu0 0.0
    %203 = vmatprep.subr.mxu0 0.0
    %204 = vmatpush2.msra.mxu0 0.0
    %205 = vmatprep.subr.mxu0 0.0
    %206 = vmatpush2.msra.mxu0 0.0
    %207 = vmatprep.subr.mxu0 0.0
    %208 = vmatpush2.msra.mxu0 0.0
    %209 = vmatprep.subr.mxu0 0.0
    %210 = vmatpush2.msra.mxu0 0.0
    %211 = vmatprep.subr.mxu0 0.0
    %212 = vmatpush2.msra.mxu0 0.0
    %213 = vmatprep.subr.mxu0 0.0
    %214 = vmatpush2.msra.mxu0 0.0
    %215 = vmatprep.subr.mxu0 0.0
    %216 = vmatpush2.msra.mxu0 0.0
    %217 = vmatprep.mubr.f32.mxu0 0.0
    %218 = vmatmul.mubr.f32.gmra.mxu0 %v147
    %v219 = vpop.f32.mrf.mxu0
    %v220 = vadd.f32 %v135, %v219
    %v221 = vpop.f32.mrf.mxu0
    %v222 = vadd.f32 %v139, %v221
    %223 = vmatprep.mubr.f32.mxu0 0.0
    %224 = vmatmul.mubr.f32.gmra.mxu0 %v148
    %v225 = vpop.f32.mrf.mxu0
    %v226 = vadd.f32 %v135, %v225
    %v227 = vpop.f32.mrf.mxu0
    %v228 = vadd.f32 %v139, %v227
    %229 = vmatprep.mubr.f32.mxu0 0.0
    %230 = vmatmul.mubr.f32.gmra.mxu0 %v149
    %v231 = vpop.f32.mrf.mxu0
    %v232 = vadd.f32 %v135, %v231
    %v233 = vpop.f32.mrf.mxu0
    %v234 = vadd.f32 %v139, %v233
    %235 = vdwg.mxu0
    %236 = vmatprep.subr.mxu0 0.0
    %237 = vmatpush1.msra.mxu0 %v129
    %238 = vmatprep.subr.mxu0 0.0
    %239 = vmatpush1.msra.mxu0 %v126
    %240 = vmatprep.subr.mxu0 0.0
    %241 = vmatpush1.msra.mxu0 %v123
    %242 = vmatprep.subr.mxu0 0.0
    %243 = vmatpush1.msra.mxu0 %v120
    %244 = vmatprep.subr.mxu0 0.0
    %245 = vmatpush1.msra.mxu0 %v117
    %246 = vmatprep.subr.mxu0 0.0
    %247 = vmatpush1.msra.mxu0 %v114
    %248 = vmatprep.subr.mxu0 0.0
    %249 = vmatpush1.msra.mxu0 %v111
    %250 = vmatprep.subr.mxu0 0.0
    %251 = vmatpush1.msra.mxu0 %v108
    %252 = vmatprep.subr.mxu0 0.0
    %253 = vmatpush1.msra.mxu0 %v105
    %254 = vmatprep.subr.mxu0 0.0
    %255 = vmatpush1.msra.mxu0 %v102
    %256 = vmatprep.subr.mxu0 0.0
    %257 = vmatpush1.msra.mxu0 %v99
    %258 = vmatprep.subr.mxu0 0.0
    %259 = vmatpush1.msra.mxu0 %v96
    %260 = vmatprep.subr.mxu0 0.0
    %261 = vmatpush1.msra.mxu0 %v93
    %262 = vmatprep.subr.mxu0 0.0
    %263 = vmatpush1.msra.mxu0 %v90
    %264 = vmatprep.subr.mxu0 0.0
    %265 = vmatpush1.msra.mxu0 %v87
    %266 = vmatprep.subr.mxu0 0.0
    %267 = vmatpush1.msra.mxu0 %v84
    %268 = vmatprep.subr.mxu0 0.0
    %269 = vmatpush2.msra.mxu0 0.0
    %270 = vmatprep.subr.mxu0 0.0
    %271 = vmatpush2.msra.mxu0 0.0
    %272 = vmatprep.subr.mxu0 0.0
    %273 = vmatpush2.msra.mxu0 0.0
    %274 = vmatprep.subr.mxu0 0.0
    %275 = vmatpush2.msra.mxu0 0.0
    %276 = vmatprep.subr.mxu0 0.0
    %277 = vmatpush2.msra.mxu0 0.0
    %278 = vmatprep.subr.mxu0 0.0
    %279 = vmatpush2.msra.mxu0 0.0
    %280 = vmatprep.subr.mxu0 0.0
    %281 = vmatpush2.msra.mxu0 0.0
    %282 = vmatprep.subr.mxu0 0.0
    %283 = vmatpush2.msra.mxu0 0.0
    %284 = vmatprep.subr.mxu0 0.0
    %285 = vmatpush2.msra.mxu0 0.0
    %286 = vmatprep.subr.mxu0 0.0
    %287 = vmatpush2.msra.mxu0 0.0
    %288 = vmatprep.subr.mxu0 0.0
    %289 = vmatpush2.msra.mxu0 0.0
    %290 = vmatprep.subr.mxu0 0.0
    %291 = vmatpush2.msra.mxu0 0.0
    %292 = vmatprep.subr.mxu0 0.0
    %293 = vmatpush2.msra.mxu0 0.0
    %294 = vmatprep.subr.mxu0 0.0
    %295 = vmatpush2.msra.mxu0 0.0
    %296 = vmatprep.subr.mxu0 0.0
    %297 = vmatpush2.msra.mxu0 0.0
    %298 = vmatprep.subr.mxu0 0.0
    %299 = vmatpush2.msra.mxu0 0.0
    %300 = vmatprep.mubr.f32.mxu0 0.0
    %301 = vmatmul.mubr.f32.gmra.mxu0 %v147
    %v302 = vpop.f32.mrf.mxu0
    %v303 = vadd.f32 %v143, %v302
    %v304 = vpop.f32.mrf.mxu0
    %305 = vmatprep.mubr.f32.mxu0 0.0
    %306 = vmatmul.mubr.f32.gmra.mxu0 %v148
    %v307 = vpop.f32.mrf.mxu0
    %v308 = vadd.f32 %v143, %v307
    %v309 = vpop.f32.mrf.mxu0
    %310 = vmatprep.mubr.f32.mxu0 0.0
    %311 = vmatmul.mubr.f32.gmra.mxu0 %v149
    %v312 = vpop.f32.mrf.mxu0
    %v313 = vadd.f32 %v143, %v312
    %v314 = vpop.f32.mrf.mxu0
    %315 = vdwg.mxu0
    %v316 = vmax.f32 %v220, 0.0
    %v317 = vmax.f32 %v222, 0.0
    %v318 = vmax.f32 %v303, 0.0
    %v319 = vmax.f32 %v226, 0.0
    %v320 = vmax.f32 %v228, 0.0
    %v321 = vmax.f32 %v308, 0.0
    %v322 = vmax.f32 %v232, 0.0
    %v323 = vmax.f32 %v234, 0.0
    %v324 = vmax.f32 %v313, 0.0
    %v334 = vcombine.low %v316, %v317
    %v335 = vcombine.high %v316, %v317
    %v336 = vcombine.high %v318, %v318
    %v337 = vcombine.low %v319, %v320
    %v338 = vcombine.high %v319, %v320
    %v339 = vcombine.high %v321, %v321
    %v340 = vcombine.low %v322, %v323
    %v341 = vcombine.high %v322, %v323
    %v342 = vcombine.high %v324, %v324
    %v346 = vcombine.low %v334, %v335
    %v347 = vcombine.high %v334, %v335
    %v348 = vcombine.low %v318, %v336
    %v349 = vcombine.high %v337, %v337
    %v350 = vcombine.low %v338, %v340
    %v351 = vcombine.high %v338, %v340
    %v352 = vcombine.low %v339, %v324
    %v353 = vcombine.high %v341, %v341
    %362 = vst [vmem:[#allocation2] sm:$0xff] %v346
    %363 = vst [vmem:[#allocation2 + $0x8] sm:$0xff] %v347
    %364 = vst [vmem:[#allocation2 + $0x10] sm:$0xff] %v348
    %365 = vst [vmem:[#allocation2 + $0x18] sm:$0xf] %v337
    %366 = vst [vmem:[#allocation2 + $0x20] sm:$0xf] %v349
    %367 = vst [vmem:[#allocation2 + $0x28] sm:$0xf] %v321
    %368 = vst [vmem:[#allocation2 + $0x30] sm:$0xff] %v350
    %369 = vst [vmem:[#allocation2 + $0x38] sm:$0xff] %v351
    %370 = vst [vmem:[#allocation2 + $0x40] sm:$0xff] %v352
    %371 = vst [vmem:[#allocation2 + $0x48] sm:$0xf] %v341
    %372 = vst [vmem:[#allocation2 + $0x50] sm:$0xf] %v353
    %373 = vst [vmem:[#allocation2 + $0x58] sm:$0xf] %v342
    %v374 = vld [vmem:[#allocation2] sm:$0xff]
    %v375 = vld [vmem:[#allocation2 + $0x8] sm:$0xff]
    %v376 = vld [vmem:[#allocation2 + $0x10] sm:$0xff]
    %v377 = vld [vmem:[#allocation2 + $0x30] sm:$0xff]
    %v378 = vld [vmem:[#allocation2 + $0x38] sm:$0xff]
    %v379 = vld [vmem:[#allocation2 + $0x40] sm:$0xff]
    %v380 = vld [vmem:[#allocation2] sm:$0xfe]
    %v381 = vld [vmem:[#allocation2 + $0x8] sm:$0xfe]
    %v382 = vld [vmem:[#allocation2 + $0x10] sm:$0xfe]
    %v383 = vld [vmem:[#allocation2 + $0x18] sm:$0x1]
    %v384 = vld [vmem:[#allocation2 + $0x20] sm:$0x1]
    %v385 = vld [vmem:[#allocation2 + $0x28] sm:$0x1]
    %v386 = vld [vmem:[#allocation2 + $0x30] sm:$0xfe]
    %v387 = vld [vmem:[#allocation2 + $0x38] sm:$0xfe]
    %v388 = vld [vmem:[#allocation2 + $0x40] sm:$0xfe]
    %v389 = vld [vmem:[#allocation2 + $0x48] sm:$0x1]
    %v390 = vld [vmem:[#allocation2 + $0x50] sm:$0x1]
    %v391 = vld [vmem:[#allocation2 + $0x58] sm:$0x1]
    %v392 = vld [vmem:[#allocation2] sm:$0xfc]
    %v393 = vld [vmem:[#allocation2 + $0x8] sm:$0xfc]
    %v394 = vld [vmem:[#allocation2 + $0x10] sm:$0xfc]
    %v395 = vld [vmem:[#allocation2 + $0x18] sm:$0x3]
    %v396 = vld [vmem:[#allocation2 + $0x20] sm:$0x3]
    %v397 = vld [vmem:[#allocation2 + $0x28] sm:$0x3]
    %v398 = vld [vmem:[#allocation2 + $0x30] sm:$0xfc]
    %v399 = vld [vmem:[#allocation2 + $0x38] sm:$0xfc]
    %v400 = vld [vmem:[#allocation2 + $0x40] sm:$0xfc]
    %v401 = vld [vmem:[#allocation2 + $0x48] sm:$0x3]
    %v402 = vld [vmem:[#allocation2 + $0x50] sm:$0x3]
    %v403 = vld [vmem:[#allocation2 + $0x58] sm:$0x3]
    %v404 = vld [vmem:[#allocation2] sm:$0xf8]
    %v405 = vld [vmem:[#allocation2 + $0x8] sm:$0xf8]
    %v406 = vld [vmem:[#allocation2 + $0x10] sm:$0xf8]
    %v407 = vld [vmem:[#allocation2 + $0x18] sm:$0x7]
    %v408 = vld [vmem:[#allocation2 + $0x20] sm:$0x7]
    %v409 = vld [vmem:[#allocation2 + $0x28] sm:$0x7]
    %v410 = vld [vmem:[#allocation2 + $0x30] sm:$0xf8]
    %v411 = vld [vmem:[#allocation2 + $0x38] sm:$0xf8]
    %v412 = vld [vmem:[#allocation2 + $0x40] sm:$0xf8]
    %v413 = vld [vmem:[#allocation2 + $0x48] sm:$0x7]
    %v414 = vld [vmem:[#allocation2 + $0x50] sm:$0x7]
    %v415 = vld [vmem:[#allocation2 + $0x58] sm:$0x7]
    %v416 = vld [vmem:[#allocation2] sm:$0xf0]
    %v417 = vld [vmem:[#allocation2 + $0x8] sm:$0xf0]
    %v418 = vld [vmem:[#allocation2 + $0x10] sm:$0xf0]
    %v419 = vld [vmem:[#allocation2 + $0x18] sm:$0xf]
    %v420 = vld [vmem:[#allocation2 + $0x20] sm:$0xf]
    %v421 = vld [vmem:[#allocation2 + $0x28] sm:$0xf]
    %v422 = vld [vmem:[#allocation2 + $0x30] sm:$0xf0]
    %v423 = vld [vmem:[#allocation2 + $0x38] sm:$0xf0]
    %v424 = vld [vmem:[#allocation2 + $0x40] sm:$0xf0]
    %v425 = vld [vmem:[#allocation2 + $0x48] sm:$0xf]
    %v426 = vld [vmem:[#allocation2 + $0x50] sm:$0xf]
    %v427 = vld [vmem:[#allocation2 + $0x58] sm:$0xf]
    %vm440 = vcmask 1046528
    %v441 = vrot.slane %v380, 1
    %v442 = vrot.slane %v383, 1
    %v443 = vsel %vm440, %v441, %v442
    %v444 = vrot.slane %v381, 1
    %v445 = vrot.slane %v384, 1
    %v446 = vsel %vm440, %v444, %v445
    %v447 = vrot.slane %v382, 1
    %v448 = vrot.slane %v385, 1
    %v449 = vsel %vm440, %v447, %v448
    %v450 = vrot.slane %v386, 1
    %v451 = vrot.slane %v389, 1
    %v452 = vsel %vm440, %v450, %v451
    %v453 = vrot.slane %v387, 1
    %v454 = vrot.slane %v390, 1
    %v455 = vsel %vm440, %v453, %v454
    %v456 = vrot.slane %v388, 1
    %v457 = vrot.slane %v391, 1
    %v458 = vsel %vm440, %v456, %v457
    %vm477 = vcmask 1045504
    %v478 = vrot.slane %v392, 2
    %v479 = vrot.slane %v395, 2
    %v480 = vsel %vm477, %v478, %v479
    %v481 = vrot.slane %v393, 2
    %v482 = vrot.slane %v396, 2
    %v483 = vsel %vm477, %v481, %v482
    %v484 = vrot.slane %v394, 2
    %v485 = vrot.slane %v397, 2
    %v486 = vsel %vm477, %v484, %v485
    %v487 = vrot.slane %v398, 2
    %v488 = vrot.slane %v401, 2
    %v489 = vsel %vm477, %v487, %v488
    %v490 = vrot.slane %v399, 2
    %v491 = vrot.slane %v402, 2
    %v492 = vsel %vm477, %v490, %v491
    %v493 = vrot.slane %v400, 2
    %v494 = vrot.slane %v403, 2
    %v495 = vsel %vm477, %v493, %v494
    %vm514 = vcmask 1044480
    %v515 = vrot.slane %v404, 3
    %v516 = vrot.slane %v407, 3
    %v517 = vsel %vm514, %v515, %v516
    %v518 = vrot.slane %v405, 3
    %v519 = vrot.slane %v408, 3
    %v520 = vsel %vm514, %v518, %v519
    %v521 = vrot.slane %v406, 3
    %v522 = vrot.slane %v409, 3
    %v523 = vsel %vm514, %v521, %v522
    %v524 = vrot.slane %v410, 3
    %v525 = vrot.slane %v413, 3
    %v526 = vsel %vm514, %v524, %v525
    %v527 = vrot.slane %v411, 3
    %v528 = vrot.slane %v414, 3
    %v529 = vsel %vm514, %v527, %v528
    %v530 = vrot.slane %v412, 3
    %v531 = vrot.slane %v415, 3
    %v532 = vsel %vm514, %v530, %v531
    %vm551 = vcmask 1043456
    %v552 = vrot.slane %v416, 4
    %v553 = vrot.slane %v419, 4
    %v554 = vsel %vm551, %v552, %v553
    %v555 = vrot.slane %v417, 4
    %v556 = vrot.slane %v420, 4
    %v557 = vsel %vm551, %v555, %v556
    %v558 = vrot.slane %v418, 4
    %v559 = vrot.slane %v421, 4
    %v560 = vsel %vm551, %v558, %v559
    %v561 = vrot.slane %v422, 4
    %v562 = vrot.slane %v425, 4
    %v563 = vsel %vm551, %v561, %v562
    %v564 = vrot.slane %v423, 4
    %v565 = vrot.slane %v426, 4
    %v566 = vsel %vm551, %v564, %v565
    %v567 = vrot.slane %v424, 4
    %v568 = vrot.slane %v427, 4
    %v569 = vsel %vm551, %v567, %v568
    %v576 = vld [vmem:[#allocation8] sm:$0xff]
    %v577 = vld [vmem:[#allocation8 + $0x8] sm:$0xff]
    %v578 = vld [vmem:[#allocation8 + $0x10] sm:$0xff]
    %v579 = vld [vmem:[#allocation8 + $0x18] sm:$0xff]
    %v580 = vld [vmem:[#allocation8 + $0x20] sm:$0xff]
    %v581 = vld [vmem:[#allocation8 + $0x28] sm:$0xff]
    %v582 = vld [vmem:[#allocation8 + $0x30] sm:$0xff]
    %v583 = vld [vmem:[#allocation8 + $0x38] sm:$0xff]
    %v584 = vld [vmem:[#allocation8 + $0x40] sm:$0xff]
    %v585 = vld [vmem:[#allocation8 + $0x48] sm:$0xff]
    %v586 = vld [vmem:[#allocation8 + $0x50] sm:$0xff]
    %v587 = vld [vmem:[#allocation8 + $0x58] sm:$0xff]
    %v588 = vld [vmem:[#allocation8 + $0x60] sm:$0xff]
    %v589 = vld [vmem:[#allocation8 + $0x68] sm:$0xff]
    %v590 = vld [vmem:[#allocation8 + $0x70] sm:$0xff]
    %v591 = vld [vmem:[#allocation8 + $0x78] sm:$0xff]
    %v592 = vld [vmem:[#allocation8 + $0x80] sm:$0xff]
    %v593 = vld [vmem:[#allocation8 + $0x88] sm:$0xff]
    %v594 = vld [vmem:[#allocation8 + $0x90] sm:$0xff]
    %v595 = vld [vmem:[#allocation8 + $0x98] sm:$0xff]
    %v596 = vld [vmem:[#allocation8 + $0xa0] sm:$0xff]
    %v597 = vld [vmem:[#allocation8 + $0xa8] sm:$0xff]
    %v598 = vld [vmem:[#allocation8 + $0xb0] sm:$0xff]
    %v599 = vld [vmem:[#allocation8 + $0xb8] sm:$0xff]
    %v600 = vld [vmem:[#allocation8 + $0xc0] sm:$0xff]
    %v601 = vld [vmem:[#allocation8 + $0xc8] sm:$0xff]
    %v602 = vld [vmem:[#allocation8 + $0xd0] sm:$0xff]
    %v603 = vld [vmem:[#allocation8 + $0xd8] sm:$0xff]
    %v604 = vld [vmem:[#allocation8 + $0xe0] sm:$0xff]
    %v605 = vld [vmem:[#allocation8 + $0xe8] sm:$0xff]
    %v606 = vld [vmem:[#allocation8 + $0xf0] sm:$0xff]
    %v607 = vld [vmem:[#allocation8 + $0xf8] sm:$0xff]
    %v608 = vld [vmem:[#allocation8 + $0x100] sm:$0xff]
    %v609 = vld [vmem:[#allocation8 + $0x108] sm:$0xff]
    %v610 = vld [vmem:[#allocation8 + $0x110] sm:$0xff]
    %v611 = vld [vmem:[#allocation8 + $0x118] sm:$0xff]
    %v612 = vld [vmem:[#allocation8 + $0x120] sm:$0xff]
    %v613 = vld [vmem:[#allocation8 + $0x128] sm:$0xff]
    %v614 = vld [vmem:[#allocation8 + $0x130] sm:$0xff]
    %v615 = vld [vmem:[#allocation8 + $0x138] sm:$0xff]
    %v616 = vld [vmem:[#allocation8 + $0x140] sm:$0xff]
    %v617 = vld [vmem:[#allocation8 + $0x148] sm:$0xff]
    %v618 = vld [vmem:[#allocation8 + $0x150] sm:$0xff]
    %v619 = vld [vmem:[#allocation8 + $0x158] sm:$0xff]
    %v620 = vld [vmem:[#allocation8 + $0x160] sm:$0xff]
    %v621 = vld [vmem:[#allocation8 + $0x168] sm:$0xff]
    %v622 = vld [vmem:[#allocation8 + $0x170] sm:$0xff]
    %v623 = vld [vmem:[#allocation8 + $0x178] sm:$0xff]
    %v624 = vld [vmem:[#allocation8 + $0x180] sm:$0xff]
    %v625 = vld [vmem:[#allocation8 + $0x188] sm:$0xff]
    %v626 = vld [vmem:[#allocation8 + $0x190] sm:$0xff]
    %v627 = vld [vmem:[#allocation8 + $0x198] sm:$0xff]
    %v628 = vld [vmem:[#allocation8 + $0x1a0] sm:$0xff]
    %v629 = vld [vmem:[#allocation8 + $0x1a8] sm:$0xff]
    %v630 = vld [vmem:[#allocation8 + $0x1b0] sm:$0xff]
    %v631 = vld [vmem:[#allocation8 + $0x1b8] sm:$0xff]
    %v632 = vld [vmem:[#allocation8 + $0x1c0] sm:$0xff]
    %v633 = vld [vmem:[#allocation8 + $0x1c8] sm:$0xff]
    %v634 = vld [vmem:[#allocation8 + $0x1d0] sm:$0xff]
    %v635 = vld [vmem:[#allocation8 + $0x1d8] sm:$0xff]
    %v636 = vld [vmem:[#allocation8 + $0x1e0] sm:$0xff]
    %v637 = vld [vmem:[#allocation8 + $0x1e8] sm:$0xff]
    %v638 = vld [vmem:[#allocation8 + $0x1f0] sm:$0xff]
    %v639 = vld [vmem:[#allocation8 + $0x1f8] sm:$0xff]
    %v640 = vld [vmem:[#allocation8 + $0x200] sm:$0xff]
    %v641 = vld [vmem:[#allocation8 + $0x208] sm:$0xff]
    %v642 = vld [vmem:[#allocation8 + $0x210] sm:$0xff]
    %v643 = vld [vmem:[#allocation8 + $0x218] sm:$0xff]
    %v644 = vld [vmem:[#allocation8 + $0x220] sm:$0xff]
    %v645 = vld [vmem:[#allocation8 + $0x228] sm:$0xff]
    %v646 = vld [vmem:[#allocation8 + $0x230] sm:$0xff]
    %v647 = vld [vmem:[#allocation8 + $0x238] sm:$0xff]
    %v648 = vld [vmem:[#allocation8 + $0x240] sm:$0xff]
    %v649 = vld [vmem:[#allocation8 + $0x248] sm:$0xff]
    %v650 = vld [vmem:[#allocation8 + $0x250] sm:$0xff]
    %v651 = vld [vmem:[#allocation8 + $0x258] sm:$0xff]
    %v652 = vld [vmem:[#allocation8 + $0x260] sm:$0xff]
    %v653 = vld [vmem:[#allocation8 + $0x268] sm:$0xff]
    %v654 = vld [vmem:[#allocation8 + $0x270] sm:$0xff]
    %v655 = vld [vmem:[#allocation8 + $0x278] sm:$0xff]
    %v656 = vld [vmem:[#allocation8 + $0x280] sm:$0xff]
    %v657 = vld [vmem:[#allocation8 + $0x288] sm:$0xff]
    %v658 = vld [vmem:[#allocation8 + $0x290] sm:$0xff]
    %v659 = vld [vmem:[#allocation8 + $0x298] sm:$0xff]
    %v660 = vld [vmem:[#allocation8 + $0x2a0] sm:$0xff]
    %v661 = vld [vmem:[#allocation8 + $0x2a8] sm:$0xff]
    %v662 = vld [vmem:[#allocation8 + $0x2b0] sm:$0xff]
    %v663 = vld [vmem:[#allocation8 + $0x2b8] sm:$0xff]
    %v664 = vld [vmem:[#allocation8 + $0x2c0] sm:$0xff]
    %v665 = vld [vmem:[#allocation8 + $0x2c8] sm:$0xff]
    %v666 = vld [vmem:[#allocation8 + $0x2d0] sm:$0xff]
    %v667 = vld [vmem:[#allocation8 + $0x2d8] sm:$0xff]
    %v668 = vld [vmem:[#allocation8 + $0x2e0] sm:$0xff]
    %v669 = vld [vmem:[#allocation8 + $0x2e8] sm:$0xff]
    %v670 = vld [vmem:[#allocation8 + $0x2f0] sm:$0xff]
    %v671 = vld [vmem:[#allocation8 + $0x2f8] sm:$0xff]
    %v672 = vld [vmem:[#allocation8 + $0x300] sm:$0xff]
    %v673 = vld [vmem:[#allocation8 + $0x308] sm:$0xff]
    %v674 = vld [vmem:[#allocation8 + $0x310] sm:$0xff]
    %v675 = vld [vmem:[#allocation8 + $0x318] sm:$0xff]
    %v676 = vld [vmem:[#allocation8 + $0x320] sm:$0xff]
    %v677 = vld [vmem:[#allocation8 + $0x328] sm:$0xff]
    %v678 = vld [vmem:[#allocation8 + $0x330] sm:$0xff]
    %v679 = vld [vmem:[#allocation8 + $0x338] sm:$0xff]
    %v680 = vld [vmem:[#allocation8 + $0x340] sm:$0xff]
    %v681 = vld [vmem:[#allocation8 + $0x348] sm:$0xff]
    %v682 = vld [vmem:[#allocation8 + $0x350] sm:$0xff]
    %v683 = vld [vmem:[#allocation8 + $0x358] sm:$0xff]
    %v684 = vld [vmem:[#allocation8 + $0x360] sm:$0xff]
    %v685 = vld [vmem:[#allocation8 + $0x368] sm:$0xff]
    %v686 = vld [vmem:[#allocation8 + $0x370] sm:$0xff]
    %v687 = vld [vmem:[#allocation8 + $0x378] sm:$0xff]
    %v688 = vld [vmem:[#allocation8 + $0x380] sm:$0xff]
    %v689 = vld [vmem:[#allocation8 + $0x388] sm:$0xff]
    %v690 = vld [vmem:[#allocation8 + $0x390] sm:$0xff]
    %v691 = vld [vmem:[#allocation8 + $0x398] sm:$0xff]
    %v692 = vld [vmem:[#allocation8 + $0x3a0] sm:$0xff]
    %v693 = vld [vmem:[#allocation8 + $0x3a8] sm:$0xff]
    %v694 = vld [vmem:[#allocation8 + $0x3b0] sm:$0xff]
    %v695 = vld [vmem:[#allocation8 + $0x3b8] sm:$0xff]
    %v696 = vld [vmem:[#allocation8 + $0x3c0] sm:$0xff]
    %v697 = vld [vmem:[#allocation8 + $0x3c8] sm:$0xff]
    %v698 = vld [vmem:[#allocation8 + $0x3d0] sm:$0xff]
    %v699 = vld [vmem:[#allocation8 + $0x3d8] sm:$0xff]
    %v700 = vld [vmem:[#allocation8 + $0x3e0] sm:$0xff]
    %v701 = vld [vmem:[#allocation8 + $0x3e8] sm:$0xff]
    %v702 = vld [vmem:[#allocation8 + $0x3f0] sm:$0xff]
    %v703 = vld [vmem:[#allocation8 + $0x3f8] sm:$0xff]
    %v704 = vld [vmem:[#allocation8 + $0x400] sm:$0xff]
    %v705 = vld [vmem:[#allocation8 + $0x408] sm:$0xff]
    %v706 = vld [vmem:[#allocation8 + $0x410] sm:$0xff]
    %v707 = vld [vmem:[#allocation8 + $0x418] sm:$0xff]
    %v708 = vld [vmem:[#allocation8 + $0x420] sm:$0xff]
    %v709 = vld [vmem:[#allocation8 + $0x428] sm:$0xff]
    %v710 = vld [vmem:[#allocation8 + $0x430] sm:$0xff]
    %v711 = vld [vmem:[#allocation8 + $0x438] sm:$0xff]
    %v712 = vld [vmem:[#allocation8 + $0x440] sm:$0xff]
    %v713 = vld [vmem:[#allocation8 + $0x448] sm:$0xff]
    %v714 = vld [vmem:[#allocation8 + $0x450] sm:$0xff]
    %v715 = vld [vmem:[#allocation8 + $0x458] sm:$0xff]
    %v716 = vld [vmem:[#allocation8 + $0x460] sm:$0xff]
    %v717 = vld [vmem:[#allocation8 + $0x468] sm:$0xff]
    %v718 = vld [vmem:[#allocation8 + $0x470] sm:$0xff]
    %v719 = vld [vmem:[#allocation8 + $0x478] sm:$0xff]
    %v720 = vld [vmem:[#allocation8 + $0x480] sm:$0xff]
    %v721 = vld [vmem:[#allocation8 + $0x488] sm:$0xff]
    %v722 = vld [vmem:[#allocation8 + $0x490] sm:$0xff]
    %v723 = vld [vmem:[#allocation8 + $0x498] sm:$0xff]
    %v724 = vld [vmem:[#allocation8 + $0x4a0] sm:$0xff]
    %v725 = vld [vmem:[#allocation8 + $0x4a8] sm:$0xff]
    %v726 = vld [vmem:[#allocation8 + $0x4b0] sm:$0xff]
    %v727 = vld [vmem:[#allocation8 + $0x4b8] sm:$0xff]
    %v728 = vld [vmem:[#allocation8 + $0x4c0] sm:$0xff]
    %v729 = vld [vmem:[#allocation8 + $0x4c8] sm:$0xff]
    %v730 = vld [vmem:[#allocation8 + $0x4d0] sm:$0xff]
    %v731 = vld [vmem:[#allocation8 + $0x4d8] sm:$0xff]
    %v732 = vld [vmem:[#allocation8 + $0x4e0] sm:$0xff]
    %v733 = vld [vmem:[#allocation8 + $0x4e8] sm:$0xff]
    %v734 = vld [vmem:[#allocation8 + $0x4f0] sm:$0xff]
    %v735 = vld [vmem:[#allocation8 + $0x4f8] sm:$0xff]
    %v736 = vld [vmem:[#allocation8 + $0x500] sm:$0xff]
    %v737 = vld [vmem:[#allocation8 + $0x508] sm:$0xff]
    %v738 = vld [vmem:[#allocation8 + $0x510] sm:$0xff]
    %v739 = vld [vmem:[#allocation8 + $0x518] sm:$0xff]
    %v740 = vld [vmem:[#allocation8 + $0x520] sm:$0xff]
    %v741 = vld [vmem:[#allocation8 + $0x528] sm:$0xff]
    %v742 = vld [vmem:[#allocation8 + $0x530] sm:$0xff]
    %v743 = vld [vmem:[#allocation8 + $0x538] sm:$0xff]
    %v744 = vld [vmem:[#allocation8 + $0x540] sm:$0xff]
    %v745 = vld [vmem:[#allocation8 + $0x548] sm:$0xff]
    %v746 = vld [vmem:[#allocation8 + $0x550] sm:$0xff]
    %v747 = vld [vmem:[#allocation8 + $0x558] sm:$0xff]
    %v748 = vld [vmem:[#allocation8 + $0x560] sm:$0xff]
    %v749 = vld [vmem:[#allocation8 + $0x568] sm:$0xff]
    %v750 = vld [vmem:[#allocation8 + $0x570] sm:$0xff]
    %v751 = vld [vmem:[#allocation8 + $0x578] sm:$0xff]
    %v752 = vld [vmem:[#allocation8 + $0x580] sm:$0xff]
    %v753 = vld [vmem:[#allocation8 + $0x588] sm:$0xff]
    %v754 = vld [vmem:[#allocation8 + $0x590] sm:$0xff]
    %v755 = vld [vmem:[#allocation8 + $0x598] sm:$0xff]
    %v756 = vld [vmem:[#allocation8 + $0x5a0] sm:$0xff]
    %v757 = vld [vmem:[#allocation8 + $0x5a8] sm:$0xff]
    %v758 = vld [vmem:[#allocation8 + $0x5b0] sm:$0xff]
    %v759 = vld [vmem:[#allocation8 + $0x5b8] sm:$0xff]
    %v760 = vld [vmem:[#allocation8 + $0x5c0] sm:$0xff]
    %v761 = vld [vmem:[#allocation8 + $0x5c8] sm:$0xff]
    %v762 = vld [vmem:[#allocation8 + $0x5d0] sm:$0xff]
    %v763 = vld [vmem:[#allocation8 + $0x5d8] sm:$0xff]
    %v764 = vld [vmem:[#allocation8 + $0x5e0] sm:$0xff]
    %v765 = vld [vmem:[#allocation8 + $0x5e8] sm:$0xff]
    %v766 = vld [vmem:[#allocation8 + $0x5f0] sm:$0xff]
    %v767 = vld [vmem:[#allocation8 + $0x5f8] sm:$0xff]
    %v768 = vld [vmem:[#allocation8 + $0x600] sm:$0xff]
    %v769 = vld [vmem:[#allocation8 + $0x608] sm:$0xff]
    %v770 = vld [vmem:[#allocation8 + $0x610] sm:$0xff]
    %v771 = vld [vmem:[#allocation8 + $0x618] sm:$0xff]
    %v772 = vld [vmem:[#allocation8 + $0x620] sm:$0xff]
    %v773 = vld [vmem:[#allocation8 + $0x628] sm:$0xff]
    %v774 = vld [vmem:[#allocation8 + $0x630] sm:$0xff]
    %v775 = vld [vmem:[#allocation8 + $0x638] sm:$0xff]
    %v776 = vld [vmem:[#allocation8 + $0x640] sm:$0xff]
    %v777 = vld [vmem:[#allocation8 + $0x648] sm:$0xff]
    %v778 = vld [vmem:[#allocation8 + $0x650] sm:$0xff]
    %v779 = vld [vmem:[#allocation8 + $0x658] sm:$0xff]
    %v780 = vld [vmem:[#allocation8 + $0x660] sm:$0xff]
    %v781 = vld [vmem:[#allocation8 + $0x668] sm:$0xff]
    %v782 = vld [vmem:[#allocation8 + $0x670] sm:$0xff]
    %v783 = vld [vmem:[#allocation8 + $0x678] sm:$0xff]
    %v784 = vld [vmem:[#allocation8 + $0x680] sm:$0xff]
    %v785 = vld [vmem:[#allocation8 + $0x688] sm:$0xff]
    %v786 = vld [vmem:[#allocation8 + $0x690] sm:$0xff]
    %v787 = vld [vmem:[#allocation8 + $0x698] sm:$0xff]
    %v788 = vld [vmem:[#allocation8 + $0x6a0] sm:$0xff]
    %v789 = vld [vmem:[#allocation8 + $0x6a8] sm:$0xff]
    %v790 = vld [vmem:[#allocation8 + $0x6b0] sm:$0xff]
    %v791 = vld [vmem:[#allocation8 + $0x6b8] sm:$0xff]
    %v792 = vld [vmem:[#allocation8 + $0x6c0] sm:$0xff]
    %v793 = vld [vmem:[#allocation8 + $0x6c8] sm:$0xff]
    %v794 = vld [vmem:[#allocation8 + $0x6d0] sm:$0xff]
    %v795 = vld [vmem:[#allocation8 + $0x6d8] sm:$0xff]
    %v796 = vld [vmem:[#allocation8 + $0x6e0] sm:$0xff]
    %v797 = vld [vmem:[#allocation8 + $0x6e8] sm:$0xff]
    %v798 = vld [vmem:[#allocation8 + $0x6f0] sm:$0xff]
    %v799 = vld [vmem:[#allocation8 + $0x6f8] sm:$0xff]
    %v800 = vld [vmem:[#allocation8 + $0x700] sm:$0xff]
    %v801 = vld [vmem:[#allocation8 + $0x708] sm:$0xff]
    %v802 = vld [vmem:[#allocation8 + $0x710] sm:$0xff]
    %v803 = vld [vmem:[#allocation8 + $0x718] sm:$0xff]
    %v804 = vld [vmem:[#allocation8 + $0x720] sm:$0xff]
    %v805 = vld [vmem:[#allocation8 + $0x728] sm:$0xff]
    %v806 = vld [vmem:[#allocation8 + $0x730] sm:$0xff]
    %v807 = vld [vmem:[#allocation8 + $0x738] sm:$0xff]
    %v808 = vld [vmem:[#allocation8 + $0x740] sm:$0xff]
    %v809 = vld [vmem:[#allocation8 + $0x748] sm:$0xff]
    %v810 = vld [vmem:[#allocation8 + $0x750] sm:$0xff]
    %v811 = vld [vmem:[#allocation8 + $0x758] sm:$0xff]
    %v812 = vld [vmem:[#allocation8 + $0x760] sm:$0xff]
    %v813 = vld [vmem:[#allocation8 + $0x768] sm:$0xff]
    %v814 = vld [vmem:[#allocation8 + $0x770] sm:$0xff]
    %v815 = vld [vmem:[#allocation8 + $0x778] sm:$0xff]
    %v816 = vld [vmem:[#allocation8 + $0x780] sm:$0xff]
    %v817 = vld [vmem:[#allocation8 + $0x788] sm:$0xff]
    %v818 = vld [vmem:[#allocation8 + $0x790] sm:$0xff]
    %v819 = vld [vmem:[#allocation8 + $0x798] sm:$0xff]
    %v820 = vld [vmem:[#allocation8 + $0x7a0] sm:$0xff]
    %v821 = vld [vmem:[#allocation8 + $0x7a8] sm:$0xff]
    %v822 = vld [vmem:[#allocation8 + $0x7b0] sm:$0xff]
    %v823 = vld [vmem:[#allocation8 + $0x7b8] sm:$0xff]
    %v824 = vld [vmem:[#allocation8 + $0x7c0] sm:$0xff]
    %v825 = vld [vmem:[#allocation8 + $0x7c8] sm:$0xff]
    %v826 = vld [vmem:[#allocation8 + $0x7d0] sm:$0xff]
    %v827 = vld [vmem:[#allocation8 + $0x7d8] sm:$0xff]
    %v828 = vld [vmem:[#allocation8 + $0x7e0] sm:$0xff]
    %v829 = vld [vmem:[#allocation8 + $0x7e8] sm:$0xff]
    %v830 = vld [vmem:[#allocation8 + $0x7f0] sm:$0xff]
    %v831 = vld [vmem:[#allocation8 + $0x7f8] sm:$0xff]
    %v832 = vld [vmem:[#allocation8 + $0x800] sm:$0xff]
    %v833 = vld [vmem:[#allocation8 + $0x808] sm:$0xff]
    %v834 = vld [vmem:[#allocation8 + $0x810] sm:$0xff]
    %v835 = vld [vmem:[#allocation8 + $0x818] sm:$0xff]
    %v836 = vld [vmem:[#allocation8 + $0x820] sm:$0xff]
    %v837 = vld [vmem:[#allocation8 + $0x828] sm:$0xff]
    %v838 = vld [vmem:[#allocation8 + $0x830] sm:$0xff]
    %v839 = vld [vmem:[#allocation8 + $0x838] sm:$0xff]
    %v840 = vld [vmem:[#allocation8 + $0x840] sm:$0xff]
    %v841 = vld [vmem:[#allocation8 + $0x848] sm:$0xff]
    %v842 = vld [vmem:[#allocation8 + $0x850] sm:$0xff]
    %v843 = vld [vmem:[#allocation8 + $0x858] sm:$0xff]
    %v844 = vld [vmem:[#allocation8 + $0x860] sm:$0xff]
    %v845 = vld [vmem:[#allocation8 + $0x868] sm:$0xff]
    %v846 = vld [vmem:[#allocation8 + $0x870] sm:$0xff]
    %v847 = vld [vmem:[#allocation8 + $0x878] sm:$0xff]
    %v848 = vld [vmem:[#allocation8 + $0x880] sm:$0xff]
    %v849 = vld [vmem:[#allocation8 + $0x888] sm:$0xff]
    %v850 = vld [vmem:[#allocation8 + $0x890] sm:$0xff]
    %v851 = vld [vmem:[#allocation8 + $0x898] sm:$0xff]
    %v852 = vld [vmem:[#allocation8 + $0x8a0] sm:$0xff]
    %v853 = vld [vmem:[#allocation8 + $0x8a8] sm:$0xff]
    %v854 = vld [vmem:[#allocation8 + $0x8b0] sm:$0xff]
    %v855 = vld [vmem:[#allocation8 + $0x8b8] sm:$0xff]
    %v856 = vld [vmem:[#allocation8 + $0x8c0] sm:$0xff]
    %v857 = vld [vmem:[#allocation8 + $0x8c8] sm:$0xff]
    %v858 = vld [vmem:[#allocation8 + $0x8d0] sm:$0xff]
    %v859 = vld [vmem:[#allocation8 + $0x8d8] sm:$0xff]
    %v860 = vld [vmem:[#allocation8 + $0x8e0] sm:$0xff]
    %v861 = vld [vmem:[#allocation8 + $0x8e8] sm:$0xff]
    %v862 = vld [vmem:[#allocation8 + $0x8f0] sm:$0xff]
    %v863 = vld [vmem:[#allocation8 + $0x8f8] sm:$0xff]
    %v864 = vld [vmem:[#allocation8 + $0x900] sm:$0xff]
    %v865 = vld [vmem:[#allocation8 + $0x908] sm:$0xff]
    %v866 = vld [vmem:[#allocation8 + $0x910] sm:$0xff]
    %v867 = vld [vmem:[#allocation8 + $0x918] sm:$0xff]
    %v868 = vld [vmem:[#allocation8 + $0x920] sm:$0xff]
    %v869 = vld [vmem:[#allocation8 + $0x928] sm:$0xff]
    %v870 = vld [vmem:[#allocation8 + $0x930] sm:$0xff]
    %v871 = vld [vmem:[#allocation8 + $0x938] sm:$0xff]
    %v872 = vld [vmem:[#allocation8 + $0x940] sm:$0xff]
    %v873 = vld [vmem:[#allocation8 + $0x948] sm:$0xff]
    %v874 = vld [vmem:[#allocation8 + $0x950] sm:$0xff]
    %v875 = vld [vmem:[#allocation8 + $0x958] sm:$0xff]
    %v876 = vld [vmem:[#allocation8 + $0x960] sm:$0xff]
    %v877 = vld [vmem:[#allocation8 + $0x968] sm:$0xff]
    %v878 = vld [vmem:[#allocation8 + $0x970] sm:$0xff]
    %v879 = vld [vmem:[#allocation8 + $0x978] sm:$0xff]
    %v880 = vld [vmem:[#allocation8 + $0x980] sm:$0xff]
    %v881 = vld [vmem:[#allocation8 + $0x988] sm:$0xff]
    %v882 = vld [vmem:[#allocation8 + $0x990] sm:$0xff]
    %v883 = vld [vmem:[#allocation8 + $0x998] sm:$0xff]
    %v884 = vld [vmem:[#allocation8 + $0x9a0] sm:$0xff]
    %v885 = vld [vmem:[#allocation8 + $0x9a8] sm:$0xff]
    %v886 = vld [vmem:[#allocation8 + $0x9b0] sm:$0xff]
    %v887 = vld [vmem:[#allocation8 + $0x9b8] sm:$0xff]
    %v888 = vld [vmem:[#allocation8 + $0x9c0] sm:$0xff]
    %v889 = vld [vmem:[#allocation8 + $0x9c8] sm:$0xff]
    %v890 = vld [vmem:[#allocation8 + $0x9d0] sm:$0xff]
    %v891 = vld [vmem:[#allocation8 + $0x9d8] sm:$0xff]
    %v892 = vld [vmem:[#allocation8 + $0x9e0] sm:$0xff]
    %v893 = vld [vmem:[#allocation8 + $0x9e8] sm:$0xff]
    %v894 = vld [vmem:[#allocation8 + $0x9f0] sm:$0xff]
    %v895 = vld [vmem:[#allocation8 + $0x9f8] sm:$0xff]
    %v896 = vld [vmem:[#allocation8 + $0xa00] sm:$0xff]
    %v897 = vld [vmem:[#allocation8 + $0xa08] sm:$0xff]
    %v898 = vld [vmem:[#allocation8 + $0xa10] sm:$0xff]
    %v899 = vld [vmem:[#allocation8 + $0xa18] sm:$0xff]
    %v900 = vld [vmem:[#allocation8 + $0xa20] sm:$0xff]
    %v901 = vld [vmem:[#allocation8 + $0xa28] sm:$0xff]
    %v902 = vld [vmem:[#allocation8 + $0xa30] sm:$0xff]
    %v903 = vld [vmem:[#allocation8 + $0xa38] sm:$0xff]
    %v904 = vld [vmem:[#allocation8 + $0xa40] sm:$0xff]
    %v905 = vld [vmem:[#allocation8 + $0xa48] sm:$0xff]
    %v906 = vld [vmem:[#allocation8 + $0xa50] sm:$0xff]
    %v907 = vld [vmem:[#allocation8 + $0xa58] sm:$0xff]
    %v908 = vld [vmem:[#allocation8 + $0xa60] sm:$0xff]
    %v909 = vld [vmem:[#allocation8 + $0xa68] sm:$0xff]
    %v910 = vld [vmem:[#allocation8 + $0xa70] sm:$0xff]
    %v911 = vld [vmem:[#allocation8 + $0xa78] sm:$0xff]
    %v912 = vld [vmem:[#allocation8 + $0xa80] sm:$0xff]
    %v913 = vld [vmem:[#allocation8 + $0xa88] sm:$0xff]
    %v914 = vld [vmem:[#allocation8 + $0xa90] sm:$0xff]
    %v915 = vld [vmem:[#allocation8 + $0xa98] sm:$0xff]
    %v916 = vld [vmem:[#allocation8 + $0xaa0] sm:$0xff]
    %v917 = vld [vmem:[#allocation8 + $0xaa8] sm:$0xff]
    %v918 = vld [vmem:[#allocation8 + $0xab0] sm:$0xff]
    %v919 = vld [vmem:[#allocation8 + $0xab8] sm:$0xff]
    %v920 = vld [vmem:[#allocation8 + $0xac0] sm:$0xff]
    %v921 = vld [vmem:[#allocation8 + $0xac8] sm:$0xff]
    %v922 = vld [vmem:[#allocation8 + $0xad0] sm:$0xff]
    %v923 = vld [vmem:[#allocation8 + $0xad8] sm:$0xff]
    %v924 = vld [vmem:[#allocation8 + $0xae0] sm:$0xff]
    %v925 = vld [vmem:[#allocation8 + $0xae8] sm:$0xff]
    %v926 = vld [vmem:[#allocation8 + $0xaf0] sm:$0xff]
    %v927 = vld [vmem:[#allocation8 + $0xaf8] sm:$0xff]
    %v928 = vld [vmem:[#allocation8 + $0xb00] sm:$0xff]
    %v929 = vld [vmem:[#allocation8 + $0xb08] sm:$0xff]
    %v930 = vld [vmem:[#allocation8 + $0xb10] sm:$0xff]
    %v931 = vld [vmem:[#allocation8 + $0xb18] sm:$0xff]
    %v932 = vld [vmem:[#allocation8 + $0xb20] sm:$0xff]
    %v933 = vld [vmem:[#allocation8 + $0xb28] sm:$0xff]
    %v934 = vld [vmem:[#allocation8 + $0xb30] sm:$0xff]
    %v935 = vld [vmem:[#allocation8 + $0xb38] sm:$0xff]
    %v936 = vld [vmem:[#allocation8 + $0xb40] sm:$0xff]
    %v937 = vld [vmem:[#allocation8 + $0xb48] sm:$0xff]
    %v938 = vld [vmem:[#allocation8 + $0xb50] sm:$0xff]
    %v939 = vld [vmem:[#allocation8 + $0xb58] sm:$0xff]
    %v940 = vld [vmem:[#allocation8 + $0xb60] sm:$0xff]
    %v941 = vld [vmem:[#allocation8 + $0xb68] sm:$0xff]
    %v942 = vld [vmem:[#allocation8 + $0xb70] sm:$0xff]
    %v943 = vld [vmem:[#allocation8 + $0xb78] sm:$0xff]
    %v944 = vld [vmem:[#allocation8 + $0xb80] sm:$0xff]
    %v945 = vld [vmem:[#allocation8 + $0xb88] sm:$0xff]
    %v946 = vld [vmem:[#allocation8 + $0xb90] sm:$0xff]
    %v947 = vld [vmem:[#allocation8 + $0xb98] sm:$0xff]
    %v948 = vld [vmem:[#allocation8 + $0xba0] sm:$0xff]
    %v949 = vld [vmem:[#allocation8 + $0xba8] sm:$0xff]
    %v950 = vld [vmem:[#allocation8 + $0xbb0] sm:$0xff]
    %v951 = vld [vmem:[#allocation8 + $0xbb8] sm:$0xff]
    %v952 = vld [vmem:[#allocation8 + $0xbc0] sm:$0xff]
    %v953 = vld [vmem:[#allocation8 + $0xbc8] sm:$0xff]
    %v954 = vld [vmem:[#allocation8 + $0xbd0] sm:$0xff]
    %v955 = vld [vmem:[#allocation8 + $0xbd8] sm:$0xff]
    %v956 = vld [vmem:[#allocation8 + $0xbe0] sm:$0xff]
    %v957 = vld [vmem:[#allocation8 + $0xbe8] sm:$0xff]
    %v958 = vld [vmem:[#allocation8 + $0xbf0] sm:$0xff]
    %v959 = vld [vmem:[#allocation8 + $0xbf8] sm:$0xff]
    %v960 = vld [vmem:[#allocation8 + $0xc00] sm:$0xff]
    %v961 = vld [vmem:[#allocation8 + $0xc08] sm:$0xff]
    %v962 = vld [vmem:[#allocation8 + $0xc10] sm:$0xff]
    %v963 = vld [vmem:[#allocation8 + $0xc18] sm:$0xff]
    %v964 = vld [vmem:[#allocation8 + $0xc20] sm:$0xff]
    %v965 = vld [vmem:[#allocation8 + $0xc28] sm:$0xff]
    %v966 = vld [vmem:[#allocation8 + $0xc30] sm:$0xff]
    %v967 = vld [vmem:[#allocation8 + $0xc38] sm:$0xff]
    %v968 = vld [vmem:[#allocation8 + $0xc40] sm:$0xff]
    %v969 = vld [vmem:[#allocation8 + $0xc48] sm:$0xff]
    %v970 = vld [vmem:[#allocation8 + $0xc50] sm:$0xff]
    %v971 = vld [vmem:[#allocation8 + $0xc58] sm:$0xff]
    %v972 = vld [vmem:[#allocation8 + $0xc60] sm:$0xff]
    %v973 = vld [vmem:[#allocation8 + $0xc68] sm:$0xff]
    %v974 = vld [vmem:[#allocation8 + $0xc70] sm:$0xff]
    %v975 = vld [vmem:[#allocation8 + $0xc78] sm:$0xff]
    %v976 = vld [vmem:[#allocation8 + $0xc80] sm:$0xff]
    %v977 = vld [vmem:[#allocation8 + $0xc88] sm:$0xff]
    %v978 = vld [vmem:[#allocation8 + $0xc90] sm:$0xff]
    %v979 = vld [vmem:[#allocation8 + $0xc98] sm:$0xff]
    %v980 = vld [vmem:[#allocation8 + $0xca0] sm:$0xff]
    %v981 = vld [vmem:[#allocation8 + $0xca8] sm:$0xff]
    %v982 = vld [vmem:[#allocation8 + $0xcb0] sm:$0xff]
    %v983 = vld [vmem:[#allocation8 + $0xcb8] sm:$0xff]
    %v984 = vld [vmem:[#allocation8 + $0xcc0] sm:$0xff]
    %v985 = vld [vmem:[#allocation8 + $0xcc8] sm:$0xff]
    %v986 = vld [vmem:[#allocation8 + $0xcd0] sm:$0xff]
    %v987 = vld [vmem:[#allocation8 + $0xcd8] sm:$0xff]
    %v988 = vld [vmem:[#allocation8 + $0xce0] sm:$0xff]
    %v989 = vld [vmem:[#allocation8 + $0xce8] sm:$0xff]
    %v990 = vld [vmem:[#allocation8 + $0xcf0] sm:$0xff]
    %v991 = vld [vmem:[#allocation8 + $0xcf8] sm:$0xff]
    %v992 = vld [vmem:[#allocation8 + $0xd00] sm:$0xff]
    %v993 = vld [vmem:[#allocation8 + $0xd08] sm:$0xff]
    %v994 = vld [vmem:[#allocation8 + $0xd10] sm:$0xff]
    %v995 = vld [vmem:[#allocation8 + $0xd18] sm:$0xff]
    %v996 = vld [vmem:[#allocation8 + $0xd20] sm:$0xff]
    %v997 = vld [vmem:[#allocation8 + $0xd28] sm:$0xff]
    %v998 = vld [vmem:[#allocation8 + $0xd30] sm:$0xff]
    %v999 = vld [vmem:[#allocation8 + $0xd38] sm:$0xff]
    %v1000 = vld [vmem:[#allocation8 + $0xd40] sm:$0xff]
    %v1001 = vld [vmem:[#allocation8 + $0xd48] sm:$0xff]
    %v1002 = vld [vmem:[#allocation8 + $0xd50] sm:$0xff]
    %v1003 = vld [vmem:[#allocation8 + $0xd58] sm:$0xff]
    %v1004 = vld [vmem:[#allocation8 + $0xd60] sm:$0xff]
    %v1005 = vld [vmem:[#allocation8 + $0xd68] sm:$0xff]
    %v1006 = vld [vmem:[#allocation8 + $0xd70] sm:$0xff]
    %v1007 = vld [vmem:[#allocation8 + $0xd78] sm:$0xff]
    %v1008 = vld [vmem:[#allocation8 + $0xd80] sm:$0xff]
    %v1009 = vld [vmem:[#allocation8 + $0xd88] sm:$0xff]
    %v1010 = vld [vmem:[#allocation8 + $0xd90] sm:$0xff]
    %v1011 = vld [vmem:[#allocation8 + $0xd98] sm:$0xff]
    %v1012 = vld [vmem:[#allocation8 + $0xda0] sm:$0xff]
    %v1013 = vld [vmem:[#allocation8 + $0xda8] sm:$0xff]
    %v1014 = vld [vmem:[#allocation8 + $0xdb0] sm:$0xff]
    %v1015 = vld [vmem:[#allocation8 + $0xdb8] sm:$0xff]
    %v1016 = vld [vmem:[#allocation8 + $0xdc0] sm:$0xff]
    %v1017 = vld [vmem:[#allocation8 + $0xdc8] sm:$0xff]
    %v1018 = vld [vmem:[#allocation8 + $0xdd0] sm:$0xff]
    %v1019 = vld [vmem:[#allocation8 + $0xdd8] sm:$0xff]
    %v1020 = vld [vmem:[#allocation8 + $0xde0] sm:$0xff]
    %v1021 = vld [vmem:[#allocation8 + $0xde8] sm:$0xff]
    %v1022 = vld [vmem:[#allocation8 + $0xdf0] sm:$0xff]
    %v1023 = vld [vmem:[#allocation8 + $0xdf8] sm:$0xff]
    %v1024 = vld [vmem:[#allocation8 + $0xe00] sm:$0xff]
    %v1025 = vld [vmem:[#allocation8 + $0xe08] sm:$0xff]
    %v1026 = vld [vmem:[#allocation8 + $0xe10] sm:$0xff]
    %v1027 = vld [vmem:[#allocation8 + $0xe18] sm:$0xff]
    %v1028 = vld [vmem:[#allocation8 + $0xe20] sm:$0xff]
    %v1029 = vld [vmem:[#allocation8 + $0xe28] sm:$0xff]
    %v1030 = vld [vmem:[#allocation8 + $0xe30] sm:$0xff]
    %v1031 = vld [vmem:[#allocation8 + $0xe38] sm:$0xff]
    %v1032 = vld [vmem:[#allocation8 + $0xe40] sm:$0xff]
    %v1033 = vld [vmem:[#allocation8 + $0xe48] sm:$0xff]
    %v1034 = vld [vmem:[#allocation8 + $0xe50] sm:$0xff]
    %v1035 = vld [vmem:[#allocation8 + $0xe58] sm:$0xff]
    %v1036 = vld [vmem:[#allocation8 + $0xe60] sm:$0xff]
    %v1037 = vld [vmem:[#allocation8 + $0xe68] sm:$0xff]
    %v1038 = vld [vmem:[#allocation8 + $0xe70] sm:$0xff]
    %v1039 = vld [vmem:[#allocation8 + $0xe78] sm:$0xff]
    %v1040 = vld [vmem:[#allocation8 + $0xe80] sm:$0xff]
    %v1041 = vld [vmem:[#allocation8 + $0xe88] sm:$0xff]
    %v1042 = vld [vmem:[#allocation8 + $0xe90] sm:$0xff]
    %v1043 = vld [vmem:[#allocation8 + $0xe98] sm:$0xff]
    %v1044 = vld [vmem:[#allocation8 + $0xea0] sm:$0xff]
    %v1045 = vld [vmem:[#allocation8 + $0xea8] sm:$0xff]
    %v1046 = vld [vmem:[#allocation8 + $0xeb0] sm:$0xff]
    %v1047 = vld [vmem:[#allocation8 + $0xeb8] sm:$0xff]
    %v1048 = vld [vmem:[#allocation8 + $0xec0] sm:$0xff]
    %v1049 = vld [vmem:[#allocation8 + $0xec8] sm:$0xff]
    %v1050 = vld [vmem:[#allocation8 + $0xed0] sm:$0xff]
    %v1051 = vld [vmem:[#allocation8 + $0xed8] sm:$0xff]
    %v1052 = vld [vmem:[#allocation8 + $0xee0] sm:$0xff]
    %v1053 = vld [vmem:[#allocation8 + $0xee8] sm:$0xff]
    %v1054 = vld [vmem:[#allocation8 + $0xef0] sm:$0xff]
    %v1055 = vld [vmem:[#allocation8 + $0xef8] sm:$0xff]
    %v1056 = vld [vmem:[#allocation9] sm:$0x3]
    %v1058 = vlaneseq
    %v1059 = vshrl.u32 %v1058, 7
    %v1060 = vsub.s32 0, %v1059
    %v1061 = vrot.slane %v1056, %v1060
    %v1062 = vlaneseq
    %v1063 = vshrl.u32 %v1062, 7
    %v1064 = vsub.s32 1, %v1063
    %v1065 = vrot.slane %v1056, %v1064
    %1068 = vmatprep.subr.mxu0 %v607
    %1069 = vmatpush1.msra.mxu0 %v606
    %1070 = vmatprep.subr.mxu0 %v605
    %1071 = vmatpush1.msra.mxu0 %v604
    %1072 = vmatprep.subr.mxu0 %v603
    %1073 = vmatpush1.msra.mxu0 %v602
    %1074 = vmatprep.subr.mxu0 %v601
    %1075 = vmatpush1.msra.mxu0 %v600
    %1076 = vmatprep.subr.mxu0 %v599
    %1077 = vmatpush1.msra.mxu0 %v598
    %1078 = vmatprep.subr.mxu0 %v597
    %1079 = vmatpush1.msra.mxu0 %v596
    %1080 = vmatprep.subr.mxu0 %v595
    %1081 = vmatpush1.msra.mxu0 %v594
    %1082 = vmatprep.subr.mxu0 %v593
    %1083 = vmatpush1.msra.mxu0 %v592
    %1084 = vmatprep.subr.mxu0 %v591
    %1085 = vmatpush1.msra.mxu0 %v590
    %1086 = vmatprep.subr.mxu0 %v589
    %1087 = vmatpush1.msra.mxu0 %v588
    %1088 = vmatprep.subr.mxu0 %v587
    %1089 = vmatpush1.msra.mxu0 %v586
    %1090 = vmatprep.subr.mxu0 %v585
    %1091 = vmatpush1.msra.mxu0 %v584
    %1092 = vmatprep.subr.mxu0 %v583
    %1093 = vmatpush1.msra.mxu0 %v582
    %1094 = vmatprep.subr.mxu0 %v581
    %1095 = vmatpush1.msra.mxu0 %v580
    %1096 = vmatprep.subr.mxu0 %v579
    %1097 = vmatpush1.msra.mxu0 %v578
    %1098 = vmatprep.subr.mxu0 %v577
    %1099 = vmatpush1.msra.mxu0 %v576
    %1100 = vmatprep.subr.mxu0 %v639
    %1101 = vmatpush2.msra.mxu0 %v638
    %1102 = vmatprep.subr.mxu0 %v637
    %1103 = vmatpush2.msra.mxu0 %v636
    %1104 = vmatprep.subr.mxu0 %v635
    %1105 = vmatpush2.msra.mxu0 %v634
    %1106 = vmatprep.subr.mxu0 %v633
    %1107 = vmatpush2.msra.mxu0 %v632
    %1108 = vmatprep.subr.mxu0 %v631
    %1109 = vmatpush2.msra.mxu0 %v630
    %1110 = vmatprep.subr.mxu0 %v629
    %1111 = vmatpush2.msra.mxu0 %v628
    %1112 = vmatprep.subr.mxu0 %v627
    %1113 = vmatpush2.msra.mxu0 %v626
    %1114 = vmatprep.subr.mxu0 %v625
    %1115 = vmatpush2.msra.mxu0 %v624
    %1116 = vmatprep.subr.mxu0 %v623
    %1117 = vmatpush2.msra.mxu0 %v622
    %1118 = vmatprep.subr.mxu0 %v621
    %1119 = vmatpush2.msra.mxu0 %v620
    %1120 = vmatprep.subr.mxu0 %v619
    %1121 = vmatpush2.msra.mxu0 %v618
    %1122 = vmatprep.subr.mxu0 %v617
    %1123 = vmatpush2.msra.mxu0 %v616
    %1124 = vmatprep.subr.mxu0 %v615
    %1125 = vmatpush2.msra.mxu0 %v614
    %1126 = vmatprep.subr.mxu0 %v613
    %1127 = vmatpush2.msra.mxu0 %v612
    %1128 = vmatprep.subr.mxu0 %v611
    %1129 = vmatpush2.msra.mxu0 %v610
    %1130 = vmatprep.subr.mxu0 %v609
    %1131 = vmatpush2.msra.mxu0 %v608
    %1132 = vmatprep.mubr.f32.mxu0 %v375
    %1133 = vmatmul.mubr.f32.gmra.mxu0 %v374
    %v1134 = vpop.f32.mrf.mxu0
    %v1135 = vadd.f32 %v1061, %v1134
    %v1136 = vpop.f32.mrf.mxu0
    %v1137 = vadd.f32 %v1065, %v1136
    %1138 = vmatprep.mubr.f32.mxu0 %v378
    %1139 = vmatmul.mubr.f32.gmra.mxu0 %v377
    %v1140 = vpop.f32.mrf.mxu0
    %v1141 = vadd.f32 %v1061, %v1140
    %v1142 = vpop.f32.mrf.mxu0
    %v1143 = vadd.f32 %v1065, %v1142
    %1144 = vdwg.mxu0
    %1145 = vmatprep.subr.mxu0 %v671
    %1146 = vmatpush1.msra.mxu0 %v670
    %1147 = vmatprep.subr.mxu0 %v669
    %1148 = vmatpush1.msra.mxu0 %v668
    %1149 = vmatprep.subr.mxu0 %v667
    %1150 = vmatpush1.msra.mxu0 %v666
    %1151 = vmatprep.subr.mxu0 %v665
    %1152 = vmatpush1.msra.mxu0 %v664
    %1153 = vmatprep.subr.mxu0 %v663
    %1154 = vmatpush1.msra.mxu0 %v662
    %1155 = vmatprep.subr.mxu0 %v661
    %1156 = vmatpush1.msra.mxu0 %v660
    %1157 = vmatprep.subr.mxu0 %v659
    %1158 = vmatpush1.msra.mxu0 %v658
    %1159 = vmatprep.subr.mxu0 %v657
    %1160 = vmatpush1.msra.mxu0 %v656
    %1161 = vmatprep.subr.mxu0 %v655
    %1162 = vmatpush1.msra.mxu0 %v654
    %1163 = vmatprep.subr.mxu0 %v653
    %1164 = vmatpush1.msra.mxu0 %v652
    %1165 = vmatprep.subr.mxu0 %v651
    %1166 = vmatpush1.msra.mxu0 %v650
    %1167 = vmatprep.subr.mxu0 %v649
    %1168 = vmatpush1.msra.mxu0 %v648
    %1169 = vmatprep.subr.mxu0 %v647
    %1170 = vmatpush1.msra.mxu0 %v646
    %1171 = vmatprep.subr.mxu0 %v645
    %1172 = vmatpush1.msra.mxu0 %v644
    %1173 = vmatprep.subr.mxu0 %v643
    %1174 = vmatpush1.msra.mxu0 %v642
    %1175 = vmatprep.subr.mxu0 %v641
    %1176 = vmatpush1.msra.mxu0 %v640
    %1177 = vmatprep.subr.mxu0 %v703
    %1178 = vmatpush2.msra.mxu0 %v702
    %1179 = vmatprep.subr.mxu0 %v701
    %1180 = vmatpush2.msra.mxu0 %v700
    %1181 = vmatprep.subr.mxu0 %v699
    %1182 = vmatpush2.msra.mxu0 %v698
    %1183 = vmatprep.subr.mxu0 %v697
    %1184 = vmatpush2.msra.mxu0 %v696
    %1185 = vmatprep.subr.mxu0 %v695
    %1186 = vmatpush2.msra.mxu0 %v694
    %1187 = vmatprep.subr.mxu0 %v693
    %1188 = vmatpush2.msra.mxu0 %v692
    %1189 = vmatprep.subr.mxu0 %v691
    %1190 = vmatpush2.msra.mxu0 %v690
    %1191 = vmatprep.subr.mxu0 %v689
    %1192 = vmatpush2.msra.mxu0 %v688
    %1193 = vmatprep.subr.mxu0 %v687
    %1194 = vmatpush2.msra.mxu0 %v686
    %1195 = vmatprep.subr.mxu0 %v685
    %1196 = vmatpush2.msra.mxu0 %v684
    %1197 = vmatprep.subr.mxu0 %v683
    %1198 = vmatpush2.msra.mxu0 %v682
    %1199 = vmatprep.subr.mxu0 %v681
    %1200 = vmatpush2.msra.mxu0 %v680
    %1201 = vmatprep.subr.mxu0 %v679
    %1202 = vmatpush2.msra.mxu0 %v678
    %1203 = vmatprep.subr.mxu0 %v677
    %1204 = vmatpush2.msra.mxu0 %v676
    %1205 = vmatprep.subr.mxu0 %v675
    %1206 = vmatpush2.msra.mxu0 %v674
    %1207 = vmatprep.subr.mxu0 %v673
    %1208 = vmatpush2.msra.mxu0 %v672
    %1209 = vmatprep.mubr.f32.mxu0 %v443
    %1210 = vmatmul.mubr.f32.gmra.mxu0 %v376
    %v1211 = vpop.f32.mrf.mxu0
    %v1212 = vadd.f32 %v1135, %v1211
    %v1213 = vpop.f32.mrf.mxu0
    %v1214 = vadd.f32 %v1137, %v1213
    %1215 = vmatprep.mubr.f32.mxu0 %v452
    %1216 = vmatmul.mubr.f32.gmra.mxu0 %v379
    %v1217 = vpop.f32.mrf.mxu0
    %v1218 = vadd.f32 %v1141, %v1217
    %v1219 = vpop.f32.mrf.mxu0
    %v1220 = vadd.f32 %v1143, %v1219
    %1221 = vdwg.mxu0
    %1222 = vmatprep.subr.mxu0 %v735
    %1223 = vmatpush1.msra.mxu0 %v734
    %1224 = vmatprep.subr.mxu0 %v733
    %1225 = vmatpush1.msra.mxu0 %v732
    %1226 = vmatprep.subr.mxu0 %v731
    %1227 = vmatpush1.msra.mxu0 %v730
    %1228 = vmatprep.subr.mxu0 %v729
    %1229 = vmatpush1.msra.mxu0 %v728
    %1230 = vmatprep.subr.mxu0 %v727
    %1231 = vmatpush1.msra.mxu0 %v726
    %1232 = vmatprep.subr.mxu0 %v725
    %1233 = vmatpush1.msra.mxu0 %v724
    %1234 = vmatprep.subr.mxu0 %v723
    %1235 = vmatpush1.msra.mxu0 %v722
    %1236 = vmatprep.subr.mxu0 %v721
    %1237 = vmatpush1.msra.mxu0 %v720
    %1238 = vmatprep.subr.mxu0 %v719
    %1239 = vmatpush1.msra.mxu0 %v718
    %1240 = vmatprep.subr.mxu0 %v717
    %1241 = vmatpush1.msra.mxu0 %v716
    %1242 = vmatprep.subr.mxu0 %v715
    %1243 = vmatpush1.msra.mxu0 %v714
    %1244 = vmatprep.subr.mxu0 %v713
    %1245 = vmatpush1.msra.mxu0 %v712
    %1246 = vmatprep.subr.mxu0 %v711
    %1247 = vmatpush1.msra.mxu0 %v710
    %1248 = vmatprep.subr.mxu0 %v709
    %1249 = vmatpush1.msra.mxu0 %v708
    %1250 = vmatprep.subr.mxu0 %v707
    %1251 = vmatpush1.msra.mxu0 %v706
    %1252 = vmatprep.subr.mxu0 %v705
    %1253 = vmatpush1.msra.mxu0 %v704
    %1254 = vmatprep.subr.mxu0 %v767
    %1255 = vmatpush2.msra.mxu0 %v766
    %1256 = vmatprep.subr.mxu0 %v765
    %1257 = vmatpush2.msra.mxu0 %v764
    %1258 = vmatprep.subr.mxu0 %v763
    %1259 = vmatpush2.msra.mxu0 %v762
    %1260 = vmatprep.subr.mxu0 %v761
    %1261 = vmatpush2.msra.mxu0 %v760
    %1262 = vmatprep.subr.mxu0 %v759
    %1263 = vmatpush2.msra.mxu0 %v758
    %1264 = vmatprep.subr.mxu0 %v757
    %1265 = vmatpush2.msra.mxu0 %v756
    %1266 = vmatprep.subr.mxu0 %v755
    %1267 = vmatpush2.msra.mxu0 %v754
    %1268 = vmatprep.subr.mxu0 %v753
    %1269 = vmatpush2.msra.mxu0 %v752
    %1270 = vmatprep.subr.mxu0 %v751
    %1271 = vmatpush2.msra.mxu0 %v750
    %1272 = vmatprep.subr.mxu0 %v749
    %1273 = vmatpush2.msra.mxu0 %v748
    %1274 = vmatprep.subr.mxu0 %v747
    %1275 = vmatpush2.msra.mxu0 %v746
    %1276 = vmatprep.subr.mxu0 %v745
    %1277 = vmatpush2.msra.mxu0 %v744
    %1278 = vmatprep.subr.mxu0 %v743
    %1279 = vmatpush2.msra.mxu0 %v742
    %1280 = vmatprep.subr.mxu0 %v741
    %1281 = vmatpush2.msra.mxu0 %v740
    %1282 = vmatprep.subr.mxu0 %v739
    %1283 = vmatpush2.msra.mxu0 %v738
    %1284 = vmatprep.subr.mxu0 %v737
    %1285 = vmatpush2.msra.mxu0 %v736
    %1286 = vmatprep.mubr.f32.mxu0 %v449
    %1287 = vmatmul.mubr.f32.gmra.mxu0 %v446
    %v1288 = vpop.f32.mrf.mxu0
    %v1289 = vadd.f32 %v1212, %v1288
    %v1290 = vpop.f32.mrf.mxu0
    %v1291 = vadd.f32 %v1214, %v1290
    %1292 = vmatprep.mubr.f32.mxu0 %v458
    %1293 = vmatmul.mubr.f32.gmra.mxu0 %v455
    %v1294 = vpop.f32.mrf.mxu0
    %v1295 = vadd.f32 %v1218, %v1294
    %v1296 = vpop.f32.mrf.mxu0
    %v1297 = vadd.f32 %v1220, %v1296
    %1298 = vdwg.mxu0
    %1299 = vmatprep.subr.mxu0 %v799
    %1300 = vmatpush1.msra.mxu0 %v798
    %1301 = vmatprep.subr.mxu0 %v797
    %1302 = vmatpush1.msra.mxu0 %v796
    %1303 = vmatprep.subr.mxu0 %v795
    %1304 = vmatpush1.msra.mxu0 %v794
    %1305 = vmatprep.subr.mxu0 %v793
    %1306 = vmatpush1.msra.mxu0 %v792
    %1307 = vmatprep.subr.mxu0 %v791
    %1308 = vmatpush1.msra.mxu0 %v790
    %1309 = vmatprep.subr.mxu0 %v789
    %1310 = vmatpush1.msra.mxu0 %v788
    %1311 = vmatprep.subr.mxu0 %v787
    %1312 = vmatpush1.msra.mxu0 %v786
    %1313 = vmatprep.subr.mxu0 %v785
    %1314 = vmatpush1.msra.mxu0 %v784
    %1315 = vmatprep.subr.mxu0 %v783
    %1316 = vmatpush1.msra.mxu0 %v782
    %1317 = vmatprep.subr.mxu0 %v781
    %1318 = vmatpush1.msra.mxu0 %v780
    %1319 = vmatprep.subr.mxu0 %v779
    %1320 = vmatpush1.msra.mxu0 %v778
    %1321 = vmatprep.subr.mxu0 %v777
    %1322 = vmatpush1.msra.mxu0 %v776
    %1323 = vmatprep.subr.mxu0 %v775
    %1324 = vmatpush1.msra.mxu0 %v774
    %1325 = vmatprep.subr.mxu0 %v773
    %1326 = vmatpush1.msra.mxu0 %v772
    %1327 = vmatprep.subr.mxu0 %v771
    %1328 = vmatpush1.msra.mxu0 %v770
    %1329 = vmatprep.subr.mxu0 %v769
    %1330 = vmatpush1.msra.mxu0 %v768
    %1331 = vmatprep.subr.mxu0 %v831
    %1332 = vmatpush2.msra.mxu0 %v830
    %1333 = vmatprep.subr.mxu0 %v829
    %1334 = vmatpush2.msra.mxu0 %v828
    %1335 = vmatprep.subr.mxu0 %v827
    %1336 = vmatpush2.msra.mxu0 %v826
    %1337 = vmatprep.subr.mxu0 %v825
    %1338 = vmatpush2.msra.mxu0 %v824
    %1339 = vmatprep.subr.mxu0 %v823
    %1340 = vmatpush2.msra.mxu0 %v822
    %1341 = vmatprep.subr.mxu0 %v821
    %1342 = vmatpush2.msra.mxu0 %v820
    %1343 = vmatprep.subr.mxu0 %v819
    %1344 = vmatpush2.msra.mxu0 %v818
    %1345 = vmatprep.subr.mxu0 %v817
    %1346 = vmatpush2.msra.mxu0 %v816
    %1347 = vmatprep.subr.mxu0 %v815
    %1348 = vmatpush2.msra.mxu0 %v814
    %1349 = vmatprep.subr.mxu0 %v813
    %1350 = vmatpush2.msra.mxu0 %v812
    %1351 = vmatprep.subr.mxu0 %v811
    %1352 = vmatpush2.msra.mxu0 %v810
    %1353 = vmatprep.subr.mxu0 %v809
    %1354 = vmatpush2.msra.mxu0 %v808
    %1355 = vmatprep.subr.mxu0 %v807
    %1356 = vmatpush2.msra.mxu0 %v806
    %1357 = vmatprep.subr.mxu0 %v805
    %1358 = vmatpush2.msra.mxu0 %v804
    %1359 = vmatprep.subr.mxu0 %v803
    %1360 = vmatpush2.msra.mxu0 %v802
    %1361 = vmatprep.subr.mxu0 %v801
    %1362 = vmatpush2.msra.mxu0 %v800
    %1363 = vmatprep.mubr.f32.mxu0 %v483
    %1364 = vmatmul.mubr.f32.gmra.mxu0 %v480
    %v1365 = vpop.f32.mrf.mxu0
    %v1366 = vadd.f32 %v1289, %v1365
    %v1367 = vpop.f32.mrf.mxu0
    %v1368 = vadd.f32 %v1291, %v1367
    %1369 = vmatprep.mubr.f32.mxu0 %v492
    %1370 = vmatmul.mubr.f32.gmra.mxu0 %v489
    %v1371 = vpop.f32.mrf.mxu0
    %v1372 = vadd.f32 %v1295, %v1371
    %v1373 = vpop.f32.mrf.mxu0
    %v1374 = vadd.f32 %v1297, %v1373
    %1375 = vdwg.mxu0
    %1376 = vmatprep.subr.mxu0 %v863
    %1377 = vmatpush1.msra.mxu0 %v862
    %1378 = vmatprep.subr.mxu0 %v861
    %1379 = vmatpush1.msra.mxu0 %v860
    %1380 = vmatprep.subr.mxu0 %v859
    %1381 = vmatpush1.msra.mxu0 %v858
    %1382 = vmatprep.subr.mxu0 %v857
    %1383 = vmatpush1.msra.mxu0 %v856
    %1384 = vmatprep.subr.mxu0 %v855
    %1385 = vmatpush1.msra.mxu0 %v854
    %1386 = vmatprep.subr.mxu0 %v853
    %1387 = vmatpush1.msra.mxu0 %v852
    %1388 = vmatprep.subr.mxu0 %v851
    %1389 = vmatpush1.msra.mxu0 %v850
    %1390 = vmatprep.subr.mxu0 %v849
    %1391 = vmatpush1.msra.mxu0 %v848
    %1392 = vmatprep.subr.mxu0 %v847
    %1393 = vmatpush1.msra.mxu0 %v846
    %1394 = vmatprep.subr.mxu0 %v845
    %1395 = vmatpush1.msra.mxu0 %v844
    %1396 = vmatprep.subr.mxu0 %v843
    %1397 = vmatpush1.msra.mxu0 %v842
    %1398 = vmatprep.subr.mxu0 %v841
    %1399 = vmatpush1.msra.mxu0 %v840
    %1400 = vmatprep.subr.mxu0 %v839
    %1401 = vmatpush1.msra.mxu0 %v838
    %1402 = vmatprep.subr.mxu0 %v837
    %1403 = vmatpush1.msra.mxu0 %v836
    %1404 = vmatprep.subr.mxu0 %v835
    %1405 = vmatpush1.msra.mxu0 %v834
    %1406 = vmatprep.subr.mxu0 %v833
    %1407 = vmatpush1.msra.mxu0 %v832
    %1408 = vmatprep.subr.mxu0 %v895
    %1409 = vmatpush2.msra.mxu0 %v894
    %1410 = vmatprep.subr.mxu0 %v893
    %1411 = vmatpush2.msra.mxu0 %v892
    %1412 = vmatprep.subr.mxu0 %v891
    %1413 = vmatpush2.msra.mxu0 %v890
    %1414 = vmatprep.subr.mxu0 %v889
    %1415 = vmatpush2.msra.mxu0 %v888
    %1416 = vmatprep.subr.mxu0 %v887
    %1417 = vmatpush2.msra.mxu0 %v886
    %1418 = vmatprep.subr.mxu0 %v885
    %1419 = vmatpush2.msra.mxu0 %v884
    %1420 = vmatprep.subr.mxu0 %v883
    %1421 = vmatpush2.msra.mxu0 %v882
    %1422 = vmatprep.subr.mxu0 %v881
    %1423 = vmatpush2.msra.mxu0 %v880
    %1424 = vmatprep.subr.mxu0 %v879
    %1425 = vmatpush2.msra.mxu0 %v878
    %1426 = vmatprep.subr.mxu0 %v877
    %1427 = vmatpush2.msra.mxu0 %v876
    %1428 = vmatprep.subr.mxu0 %v875
    %1429 = vmatpush2.msra.mxu0 %v874
    %1430 = vmatprep.subr.mxu0 %v873
    %1431 = vmatpush2.msra.mxu0 %v872
    %1432 = vmatprep.subr.mxu0 %v871
    %1433 = vmatpush2.msra.mxu0 %v870
    %1434 = vmatprep.subr.mxu0 %v869
    %1435 = vmatpush2.msra.mxu0 %v868
    %1436 = vmatprep.subr.mxu0 %v867
    %1437 = vmatpush2.msra.mxu0 %v866
    %1438 = vmatprep.subr.mxu0 %v865
    %1439 = vmatpush2.msra.mxu0 %v864
    %1440 = vmatprep.mubr.f32.mxu0 %v517
    %1441 = vmatmul.mubr.f32.gmra.mxu0 %v486
    %v1442 = vpop.f32.mrf.mxu0
    %v1443 = vadd.f32 %v1366, %v1442
    %v1444 = vpop.f32.mrf.mxu0
    %v1445 = vadd.f32 %v1368, %v1444
    %1446 = vmatprep.mubr.f32.mxu0 %v526
    %1447 = vmatmul.mubr.f32.gmra.mxu0 %v495
    %v1448 = vpop.f32.mrf.mxu0
    %v1449 = vadd.f32 %v1372, %v1448
    %v1450 = vpop.f32.mrf.mxu0
    %v1451 = vadd.f32 %v1374, %v1450
    %1452 = vdwg.mxu0
    %1453 = vmatprep.subr.mxu0 %v927
    %1454 = vmatpush1.msra.mxu0 %v926
    %1455 = vmatprep.subr.mxu0 %v925
    %1456 = vmatpush1.msra.mxu0 %v924
    %1457 = vmatprep.subr.mxu0 %v923
    %1458 = vmatpush1.msra.mxu0 %v922
    %1459 = vmatprep.subr.mxu0 %v921
    %1460 = vmatpush1.msra.mxu0 %v920
    %1461 = vmatprep.subr.mxu0 %v919
    %1462 = vmatpush1.msra.mxu0 %v918
    %1463 = vmatprep.subr.mxu0 %v917
    %1464 = vmatpush1.msra.mxu0 %v916
    %1465 = vmatprep.subr.mxu0 %v915
    %1466 = vmatpush1.msra.mxu0 %v914
    %1467 = vmatprep.subr.mxu0 %v913
    %1468 = vmatpush1.msra.mxu0 %v912
    %1469 = vmatprep.subr.mxu0 %v911
    %1470 = vmatpush1.msra.mxu0 %v910
    %1471 = vmatprep.subr.mxu0 %v909
    %1472 = vmatpush1.msra.mxu0 %v908
    %1473 = vmatprep.subr.mxu0 %v907
    %1474 = vmatpush1.msra.mxu0 %v906
    %1475 = vmatprep.subr.mxu0 %v905
    %1476 = vmatpush1.msra.mxu0 %v904
    %1477 = vmatprep.subr.mxu0 %v903
    %1478 = vmatpush1.msra.mxu0 %v902
    %1479 = vmatprep.subr.mxu0 %v901
    %1480 = vmatpush1.msra.mxu0 %v900
    %1481 = vmatprep.subr.mxu0 %v899
    %1482 = vmatpush1.msra.mxu0 %v898
    %1483 = vmatprep.subr.mxu0 %v897
    %1484 = vmatpush1.msra.mxu0 %v896
    %1485 = vmatprep.subr.mxu0 %v959
    %1486 = vmatpush2.msra.mxu0 %v958
    %1487 = vmatprep.subr.mxu0 %v957
    %1488 = vmatpush2.msra.mxu0 %v956
    %1489 = vmatprep.subr.mxu0 %v955
    %1490 = vmatpush2.msra.mxu0 %v954
    %1491 = vmatprep.subr.mxu0 %v953
    %1492 = vmatpush2.msra.mxu0 %v952
    %1493 = vmatprep.subr.mxu0 %v951
    %1494 = vmatpush2.msra.mxu0 %v950
    %1495 = vmatprep.subr.mxu0 %v949
    %1496 = vmatpush2.msra.mxu0 %v948
    %1497 = vmatprep.subr.mxu0 %v947
    %1498 = vmatpush2.msra.mxu0 %v946
    %1499 = vmatprep.subr.mxu0 %v945
    %1500 = vmatpush2.msra.mxu0 %v944
    %1501 = vmatprep.subr.mxu0 %v943
    %1502 = vmatpush2.msra.mxu0 %v942
    %1503 = vmatprep.subr.mxu0 %v941
    %1504 = vmatpush2.msra.mxu0 %v940
    %1505 = vmatprep.subr.mxu0 %v939
    %1506 = vmatpush2.msra.mxu0 %v938
    %1507 = vmatprep.subr.mxu0 %v937
    %1508 = vmatpush2.msra.mxu0 %v936
    %1509 = vmatprep.subr.mxu0 %v935
    %1510 = vmatpush2.msra.mxu0 %v934
    %1511 = vmatprep.subr.mxu0 %v933
    %1512 = vmatpush2.msra.mxu0 %v932
    %1513 = vmatprep.subr.mxu0 %v931
    %1514 = vmatpush2.msra.mxu0 %v930
    %1515 = vmatprep.subr.mxu0 %v929
    %1516 = vmatpush2.msra.mxu0 %v928
    %1517 = vmatprep.mubr.f32.mxu0 %v523
    %1518 = vmatmul.mubr.f32.gmra.mxu0 %v520
    %v1519 = vpop.f32.mrf.mxu0
    %v1520 = vadd.f32 %v1443, %v1519
    %v1521 = vpop.f32.mrf.mxu0
    %v1522 = vadd.f32 %v1445, %v1521
    %1523 = vmatprep.mubr.f32.mxu0 %v532
    %1524 = vmatmul.mubr.f32.gmra.mxu0 %v529
    %v1525 = vpop.f32.mrf.mxu0
    %v1526 = vadd.f32 %v1449, %v1525
    %v1527 = vpop.f32.mrf.mxu0
    %v1528 = vadd.f32 %v1451, %v1527
    %1529 = vdwg.mxu0
    %1530 = vmatprep.subr.mxu0 %v991
    %1531 = vmatpush1.msra.mxu0 %v990
    %1532 = vmatprep.subr.mxu0 %v989
    %1533 = vmatpush1.msra.mxu0 %v988
    %1534 = vmatprep.subr.mxu0 %v987
    %1535 = vmatpush1.msra.mxu0 %v986
    %1536 = vmatprep.subr.mxu0 %v985
    %1537 = vmatpush1.msra.mxu0 %v984
    %1538 = vmatprep.subr.mxu0 %v983
    %1539 = vmatpush1.msra.mxu0 %v982
    %1540 = vmatprep.subr.mxu0 %v981
    %1541 = vmatpush1.msra.mxu0 %v980
    %1542 = vmatprep.subr.mxu0 %v979
    %1543 = vmatpush1.msra.mxu0 %v978
    %1544 = vmatprep.subr.mxu0 %v977
    %1545 = vmatpush1.msra.mxu0 %v976
    %1546 = vmatprep.subr.mxu0 %v975
    %1547 = vmatpush1.msra.mxu0 %v974
    %1548 = vmatprep.subr.mxu0 %v973
    %1549 = vmatpush1.msra.mxu0 %v972
    %1550 = vmatprep.subr.mxu0 %v971
    %1551 = vmatpush1.msra.mxu0 %v970
    %1552 = vmatprep.subr.mxu0 %v969
    %1553 = vmatpush1.msra.mxu0 %v968
    %1554 = vmatprep.subr.mxu0 %v967
    %1555 = vmatpush1.msra.mxu0 %v966
    %1556 = vmatprep.subr.mxu0 %v965
    %1557 = vmatpush1.msra.mxu0 %v964
    %1558 = vmatprep.subr.mxu0 %v963
    %1559 = vmatpush1.msra.mxu0 %v962
    %1560 = vmatprep.subr.mxu0 %v961
    %1561 = vmatpush1.msra.mxu0 %v960
    %1562 = vmatprep.subr.mxu0 %v1023
    %1563 = vmatpush2.msra.mxu0 %v1022
    %1564 = vmatprep.subr.mxu0 %v1021
    %1565 = vmatpush2.msra.mxu0 %v1020
    %1566 = vmatprep.subr.mxu0 %v1019
    %1567 = vmatpush2.msra.mxu0 %v1018
    %1568 = vmatprep.subr.mxu0 %v1017
    %1569 = vmatpush2.msra.mxu0 %v1016
    %1570 = vmatprep.subr.mxu0 %v1015
    %1571 = vmatpush2.msra.mxu0 %v1014
    %1572 = vmatprep.subr.mxu0 %v1013
    %1573 = vmatpush2.msra.mxu0 %v1012
    %1574 = vmatprep.subr.mxu0 %v1011
    %1575 = vmatpush2.msra.mxu0 %v1010
    %1576 = vmatprep.subr.mxu0 %v1009
    %1577 = vmatpush2.msra.mxu0 %v1008
    %1578 = vmatprep.subr.mxu0 %v1007
    %1579 = vmatpush2.msra.mxu0 %v1006
    %1580 = vmatprep.subr.mxu0 %v1005
    %1581 = vmatpush2.msra.mxu0 %v1004
    %1582 = vmatprep.subr.mxu0 %v1003
    %1583 = vmatpush2.msra.mxu0 %v1002
    %1584 = vmatprep.subr.mxu0 %v1001
    %1585 = vmatpush2.msra.mxu0 %v1000
    %1586 = vmatprep.subr.mxu0 %v999
    %1587 = vmatpush2.msra.mxu0 %v998
    %1588 = vmatprep.subr.mxu0 %v997
    %1589 = vmatpush2.msra.mxu0 %v996
    %1590 = vmatprep.subr.mxu0 %v995
    %1591 = vmatpush2.msra.mxu0 %v994
    %1592 = vmatprep.subr.mxu0 %v993
    %1593 = vmatpush2.msra.mxu0 %v992
    %1594 = vmatprep.mubr.f32.mxu0 %v557
    %1595 = vmatmul.mubr.f32.gmra.mxu0 %v554
    %v1596 = vpop.f32.mrf.mxu0
    %v1597 = vadd.f32 %v1520, %v1596
    %v1598 = vpop.f32.mrf.mxu0
    %v1599 = vadd.f32 %v1522, %v1598
    %1600 = vmatprep.mubr.f32.mxu0 %v566
    %1601 = vmatmul.mubr.f32.gmra.mxu0 %v563
    %v1602 = vpop.f32.mrf.mxu0
    %v1603 = vadd.f32 %v1526, %v1602
    %v1604 = vpop.f32.mrf.mxu0
    %v1605 = vadd.f32 %v1528, %v1604
    %1606 = vdwg.mxu0
    %1607 = vmatprep.subr.mxu0 %v1055
    %1608 = vmatpush1.msra.mxu0 %v1054
    %1609 = vmatprep.subr.mxu0 %v1053
    %1610 = vmatpush1.msra.mxu0 %v1052
    %1611 = vmatprep.subr.mxu0 %v1051
    %1612 = vmatpush1.msra.mxu0 %v1050
    %1613 = vmatprep.subr.mxu0 %v1049
    %1614 = vmatpush1.msra.mxu0 %v1048
    %1615 = vmatprep.subr.mxu0 %v1047
    %1616 = vmatpush1.msra.mxu0 %v1046
    %1617 = vmatprep.subr.mxu0 %v1045
    %1618 = vmatpush1.msra.mxu0 %v1044
    %1619 = vmatprep.subr.mxu0 %v1043
    %1620 = vmatpush1.msra.mxu0 %v1042
    %1621 = vmatprep.subr.mxu0 %v1041
    %1622 = vmatpush1.msra.mxu0 %v1040
    %1623 = vmatprep.subr.mxu0 %v1039
    %1624 = vmatpush1.msra.mxu0 %v1038
    %1625 = vmatprep.subr.mxu0 %v1037
    %1626 = vmatpush1.msra.mxu0 %v1036
    %1627 = vmatprep.subr.mxu0 %v1035
    %1628 = vmatpush1.msra.mxu0 %v1034
    %1629 = vmatprep.subr.mxu0 %v1033
    %1630 = vmatpush1.msra.mxu0 %v1032
    %1631 = vmatprep.subr.mxu0 %v1031
    %1632 = vmatpush1.msra.mxu0 %v1030
    %1633 = vmatprep.subr.mxu0 %v1029
    %1634 = vmatpush1.msra.mxu0 %v1028
    %1635 = vmatprep.subr.mxu0 %v1027
    %1636 = vmatpush1.msra.mxu0 %v1026
    %1637 = vmatprep.subr.mxu0 %v1025
    %1638 = vmatpush1.msra.mxu0 %v1024
    %1639 = vmatprep.subr.mxu0 0.0
    %1640 = vmatpush2.msra.mxu0 0.0
    %1641 = vmatprep.subr.mxu0 0.0
    %1642 = vmatpush2.msra.mxu0 0.0
    %1643 = vmatprep.subr.mxu0 0.0
    %1644 = vmatpush2.msra.mxu0 0.0
    %1645 = vmatprep.subr.mxu0 0.0
    %1646 = vmatpush2.msra.mxu0 0.0
    %1647 = vmatprep.subr.mxu0 0.0
    %1648 = vmatpush2.msra.mxu0 0.0
    %1649 = vmatprep.subr.mxu0 0.0
    %1650 = vmatpush2.msra.mxu0 0.0
    %1651 = vmatprep.subr.mxu0 0.0
    %1652 = vmatpush2.msra.mxu0 0.0
    %1653 = vmatprep.subr.mxu0 0.0
    %1654 = vmatpush2.msra.mxu0 0.0
    %1655 = vmatprep.subr.mxu0 0.0
    %1656 = vmatpush2.msra.mxu0 0.0
    %1657 = vmatprep.subr.mxu0 0.0
    %1658 = vmatpush2.msra.mxu0 0.0
    %1659 = vmatprep.subr.mxu0 0.0
    %1660 = vmatpush2.msra.mxu0 0.0
    %1661 = vmatprep.subr.mxu0 0.0
    %1662 = vmatpush2.msra.mxu0 0.0
    %1663 = vmatprep.subr.mxu0 0.0
    %1664 = vmatpush2.msra.mxu0 0.0
    %1665 = vmatprep.subr.mxu0 0.0
    %1666 = vmatpush2.msra.mxu0 0.0
    %1667 = vmatprep.subr.mxu0 0.0
    %1668 = vmatpush2.msra.mxu0 0.0
    %1669 = vmatprep.subr.mxu0 0.0
    %1670 = vmatpush2.msra.mxu0 0.0
    %1671 = vmatprep.mubr.f32.mxu0 0.0
    %1672 = vmatmul.mubr.f32.gmra.mxu0 %v560
    %v1673 = vpop.f32.mrf.mxu0
    %v1674 = vadd.f32 %v1597, %v1673
    %v1675 = vpop.f32.mrf.mxu0
    %v1676 = vadd.f32 %v1599, %v1675
    %1677 = vmatprep.mubr.f32.mxu0 0.0
    %1678 = vmatmul.mubr.f32.gmra.mxu0 %v569
    %v1679 = vpop.f32.mrf.mxu0
    %v1680 = vadd.f32 %v1603, %v1679
    %v1681 = vpop.f32.mrf.mxu0
    %v1682 = vadd.f32 %v1605, %v1681
    %1683 = vdwg.mxu0
    %v1684 = vmax.f32 %v1674, 0.0
    %v1685 = vmax.f32 %v1676, 0.0
    %v1686 = vmax.f32 %v1680, 0.0
    %v1687 = vmax.f32 %v1682, 0.0
    %1688 = vst [vmem:[#allocation11] sm:$0xff] %v1684
    %1689 = vst [vmem:[#allocation11 + $0x8] sm:$0xff] %v1685
    %1690 = vst [vmem:[#allocation11 + $0x10] sm:$0xff] %v1686
    %1691 = vst [vmem:[#allocation11 + $0x18] sm:$0xff] %v1687
    // Predicated region
    $region38: #{tpu_custom_call.1} parent=1 // pred_check
      _
    $region39: #{tpu_custom_call.1} parent=1 // pred_check_branch
      %1693 = sbr.rel (0) target = $region41
    $region40: #{tpu_custom_call.1} parent=1 // pred_region
      %s1695 = ssub.s32 512, 512
      %1696 = vsyncadd [#allocation5], %s1695
      %s1697 = sshll.u32 [#allocation11], 4
      %s1698 = int_to_ptr.vmem [resolvable:$true] %s1697
      %1703 = dma.vmem_to_hbm [thread:$0]  %s1698, 512, %s5, [#allocation5], 256, 256, 16
    $region41: #{tpu_custom_call.1} parent=1 // pred_fallthru
      _
    // Predicated region
    $region42: #{tpu_custom_call.1} parent=1 // pred_check
      _
    $region43: #{tpu_custom_call.1} parent=1 // pred_check_branch
      %1705 = sbr.rel (0) target = $region45
    $region44: #{tpu_custom_call.1} parent=1 // pred_region
      %1706 = dma.done [#allocation5], 512
    $region45: #{tpu_custom_call.1} parent=1 // pred_fallthru
      _
    %1707 = vsyncpa [#allocation4], 1
    %1708 = vsyncpa [#allocation7], 1
    %1709 = vsyncpa [#allocation10], 1
    %1710 = vsyncpa [#allocation5], 1

</llo_original>
